<compile_context>
chip_gen: v5e
topology: v5e:2x2
jax: 0.10.0
libtpu: 0.0.40
codegen_flags: <defaults>
</compile_context>

<pallas_src>
import numpy as np
import jax
import jax.numpy as jnp
from jax.experimental import pallas as pl
from jax.experimental.pallas import tpu as pltpu

# ----------------------------- config ---------------------------------------
N_FEATURES = 4     # config['n_features']
N_HIDDEN   = 16    # config['n_hidden']
N_LAYERS   = 1     # config['n_rnn_layers']
DIRECTIONS = 1     # config['rnn_directions'] (bidirectional=False)
N_ACTION   = 1     # config['n_action']
BATCH      = 2
SEQ        = 8

FEAT  = N_HIDDEN * N_LAYERS * DIRECTIONS   # feature_extractor dim (16)
V_HID = FEAT * 2                           # ValueModule last_hidden (32)
G_HID = FEAT                               # GlucoseModel last_hidden (16)

# ----------------------- packed parameter slab layout ------------------------
# Single f32 slab (SLAB_ROWS, SLAB_COLS); one HBM->VMEM DMA for all params.
SLAB_COLS = 4 * N_HIDDEN                   # 64
R_WX    = 0      # (F, 4H)  gate order i,f,g,o ; g columns pre-scaled x2
R_WH    = 8      # (H, 4H)  g columns pre-scaled x2
R_BL    = 24     # (1, 4H)  b_ih + b_hh       ; g columns pre-scaled x2
R_HEADS = 32     # (FEAT, V_HID + G_HID) = [w1 | wg1h], cols 0:48
R_W2    = 48     # (V_HID, V_HID), cols 0:32
R_W3    = 80     # (V_HID, V_HID), cols 0:32
R_B1    = 112    # cols 0:V_HID
R_B2    = 113    # cols 0:V_HID
R_B3    = 114    # cols 0:V_HID
R_BG1   = 115    # cols V_HID:V_HID+G_HID   (lane-aligned with head glucose slice)
R_WG1A  = 116    # cols V_HID:V_HID+G_HID
R_WVT   = 117    # cols 0:V_HID             (value weight, transposed row)
R_WMUT  = 118    # cols V_HID:V_HID+G_HID   (cgm_mu weight, transposed row)
R_WSGT  = 119    # cols V_HID:V_HID+G_HID   (cgm_sigma weight, transposed row)
R_SCAL  = 120    # col 0: bv, col 1: bmu, col 2: bsig
SLAB_ROWS = 128


# ----------------------------- kernel ---------------------------------------
def critic_kernel(s_ref, w_ref, out_ref):
    """s_ref: (T*B + B + 1, F) = time-major state rows, then B action rows
    (col 0), then one z row (col 0). w_ref: packed params. out_ref: (B, 4)."""
    f32 = jnp.float32
    H, F, B, T = N_HIDDEN, N_FEATURES, BATCH, SEQ
    TB = T * B

    def dot(a, b):  # default matmul precision on purpose (review item 8)
        return jnp.dot(a, b, preferred_element_type=f32)

    def relu(x):
        return jnp.maximum(x, 0.0)

    def tree_sum(xs):  # balanced add tree -> short VPU dependence chain
        while len(xs) > 1:
            nxt = [xs[i] + xs[i + 1] for i in range(0, len(xs) - 1, 2)]
            if len(xs) % 2 == 1:
                nxt.append(xs[-1])
            xs = nxt
        return xs[0]

    # -------- FeatureExtractor: 1-layer unidirectional LSTM -----------------
    wx = w_ref[R_WX:R_WX + F, :]             # (F, 4H)
    bl = w_ref[R_BL:R_BL + 1, :]             # (1, 4H)

    # Hoisted input projection: ONE MXU push for the whole sequence.
    xp = dot(s_ref[0:TB, :], wx) + bl        # (TB, 4H)
    # Per-step slices + Wh rows hoisted out of the recurrence (loop-invariant,
    # so their extracts are off the serial chain).
    xp_steps = [xp[t * B:(t + 1) * B, :] for t in range(T)]
    wh_rows = [w_ref[R_WH + k:R_WH + k + 1, :] for k in range(H)]   # (1, 4H) each

    h = jnp.zeros((B, H), f32)
    c = jnp.zeros((B, H), f32)
    for t in range(T):                       # static trip count -> fully unrolled
        # Recurrent matvec on VPU/XLU: 16 broadcast-multiply-adds on a (B,4H)
        # slab instead of a dependent MXU push per step.
        terms = [h[:, k:k + 1] * wh_rows[k] for k in range(H)]
        gates = xp_steps[t] + tree_sum(terms)            # (B, 4H)
        # Single transcendental for all 4 gates:
        #   i,f,o: sigmoid(a) = 0.5*tanh(0.5*a) + 0.5
        #   g:     tanh(a)    (its pre-activation columns were pre-scaled x2)
        tg = jnp.tanh(0.5 * gates)
        sg = 0.5 * tg + 0.5
        i = sg[:, 0:H]
        f = sg[:, H:2 * H]
        g = tg[:, 2 * H:3 * H]
        o = sg[:, 3 * H:4 * H]
        c = f * c + i * g
        h = o * jnp.tanh(c)                  # final h == hid.view(B, -1)

    # -------- shared first layer of both heads (one MXU push) ---------------
    w_heads = w_ref[R_HEADS:R_HEADS + FEAT, 0:V_HID + G_HID]   # [w1 | wg1h]
    head = dot(h, w_heads)                                     # (B, 48)

    # -------- ValueModule ----------------------------------------------------
    b1  = w_ref[R_B1:R_B1 + 1, 0:V_HID]
    b2  = w_ref[R_B2:R_B2 + 1, 0:V_HID]
    b3  = w_ref[R_B3:R_B3 + 1, 0:V_HID]
    w2  = w_ref[R_W2:R_W2 + V_HID, 0:V_HID]
    w3  = w_ref[R_W3:R_W3 + V_HID, 0:V_HID]
    wvT = w_ref[R_WVT:R_WVT + 1, 0:V_HID]
    bv  = w_ref[R_SCAL:R_SCAL + 1, 0:1]

    f1 = relu(head[:, 0:V_HID] + b1)
    f2 = relu(dot(f1, w2) + b2)
    f3 = relu(dot(f2, w3) + b3)
    # 32 -> 1 projection as a lane reduce (no MXU push on this tail)
    value = jnp.sum(f3 * wvT, axis=1, keepdims=True) + bv      # (B, 1)

    # -------- GlucoseModel (depends only on `head`: overlaps f2/f3 MXU) -----
    bg1  = w_ref[R_BG1:R_BG1 + 1, V_HID:V_HID + G_HID]
    wg1a = w_ref[R_WG1A:R_WG1A + 1, V_HID:V_HID + G_HID]
    wmuT = w_ref[R_WMUT:R_WMUT + 1, V_HID:V_HID + G_HID]
    wsgT = w_ref[R_WSGT:R_WSGT + 1, V_HID:V_HID + G_HID]
    bmu  = w_ref[R_SCAL:R_SCAL + 1, 1:2]
    bsig = w_ref[R_SCAL:R_SCAL + 1, 2:3]

    a  = s_ref[TB:TB + B, 0:1]              # action rows folded into state slab
    zv = s_ref[TB + B:TB + B + 1, 0:1]      # host-sampled N(0,1) scalar

    # concat(lstm_out, action) @ Wg1 == head_glucose_part + action * wg1a
    # (A=1 -> broadcast multiply; wg1a/bg1 are lane-aligned with the head slice)
    g1 = relu(head[:, V_HID:V_HID + G_HID] + a * wg1a + bg1)   # (B, G_HID)
    mu = jnp.tanh(jnp.sum(g1 * wmuT, axis=1, keepdims=True) + bmu)
    sp = jnp.sum(g1 * wsgT, axis=1, keepdims=True) + bsig + 1e-5
    # numerically stable softplus
    sig = jnp.maximum(sp, 0.0) + jnp.log(1.0 + jnp.exp(-jnp.abs(sp)))
    cgm = jnp.clip(mu + sig * zv, -1.0, 1.0)

    out_ref[...] = jnp.concatenate([value, mu, sig, cgm], axis=1)   # (B, 4)


# ----------------------------- wrapper ---------------------------------------
@jax.jit
def critic_forward(s_btf, action, slab, z):
    """s_btf: (B, T, F) batch_first like PyTorch; action: (B, A); z: (1, 1)."""
    B, T, F = s_btf.shape
    # Time-major flatten (tiny one-time transpose in XLA) + fold action/z into
    # extra rows so the pallas_call has only two tensor DMAs (state, params).
    s_flat = jnp.transpose(s_btf, (1, 0, 2)).reshape(T * B, F)
    extra = jnp.zeros((B + 1, F), jnp.float32)
    extra = extra.at[0:B, 0:1].set(action)
    extra = extra.at[B, 0].set(z[0, 0])
    s_ext = jnp.concatenate([s_flat, extra], axis=0)    # (T*B + B + 1, F)

    vmem = pl.BlockSpec(memory_space=pltpu.MemorySpace.VMEM)
    out = pl.pallas_call(
        critic_kernel,
        out_shape=jax.ShapeDtypeStruct((B, 4), jnp.float32),
        in_specs=[vmem, vmem],
        out_specs=vmem,
    )(s_ext, slab)
    return out[:, 0:1], out[:, 1:2], out[:, 2:3], out[:, 3:4]


# ----------------------------- params ----------------------------------------
def init_params(key):
    ks = iter(jax.random.split(key, 64))

    def u(shape, fan_in):
        bound = 1.0 / np.sqrt(fan_in)
        return jax.random.uniform(next(ks), shape, jnp.float32, -bound, bound)

    def normed_linear_T(in_dim, out_dim, scale=0.1):
        # PyTorch: weight (out, in), normalized over dim=1, scaled; return W^T.
        w = u((out_dim, in_dim), in_dim)
        w = w * (scale / jnp.linalg.norm(w, axis=1, keepdims=True))
        b = u((1, out_dim), in_dim)
        return w.T, b

    H, F, A = N_HIDDEN, N_FEATURES, N_ACTION
    p = {}
    # LSTM (PyTorch gate order i, f, g, o); biases combined b_ih + b_hh.
    for name in ("wxi", "wxf", "wxg", "wxo"):
        p[name] = u((F, H), H)
    for name in ("whi", "whf", "whg", "who"):
        p[name] = u((H, H), H)
    for name in ("bi", "bf", "bg", "bo"):
        p[name] = u((1, H), H) + u((1, H), H)
    # ValueModule
    p["w1"], p["b1"] = u((FEAT, V_HID), FEAT), u((1, V_HID), FEAT)
    p["w2"], p["b2"] = u((V_HID, V_HID), V_HID), u((1, V_HID), V_HID)
    p["w3"], p["b3"] = u((V_HID, V_HID), V_HID), u((1, V_HID), V_HID)
    p["wv"], p["bv"] = normed_linear_T(V_HID, A, 0.1)
    # GlucoseModel: Linear(FEAT+A, G_HID), split into the FEAT and A parts.
    wg1_full = u((FEAT + A, G_HID), FEAT + A)
    p["wg1h"], p["wg1a"] = wg1_full[:FEAT], wg1_full[FEAT:]
    p["bg1"] = u((1, G_HID), FEAT + A)
    p["wmu"], p["bmu"] = normed_linear_T(G_HID, A, 0.1)
    p["wsig"], p["bsig"] = normed_linear_T(G_HID, A, 0.1)
    return p


def pack_params(p):
    """Pack all weights/biases into one (SLAB_ROWS, SLAB_COLS) f32 slab."""
    H, F = N_HIDDEN, N_FEATURES
    slab = np.zeros((SLAB_ROWS, SLAB_COLS), np.float32)

    def npx(x):
        return np.asarray(x, np.float32)

    # Pre-scale the g-gate pre-activation by 2 so a single tanh(0.5*gates)
    # yields sigmoid for i/f/o and tanh for g (exact identity; x2 is exact).
    gscale = np.ones((1, 4 * H), np.float32)
    gscale[0, 2 * H:3 * H] = 2.0

    wx = npx(jnp.concatenate([p["wxi"], p["wxf"], p["wxg"], p["wxo"]], axis=1)) * gscale
    wh = npx(jnp.concatenate([p["whi"], p["whf"], p["whg"], p["who"]], axis=1)) * gscale
    bl = npx(jnp.concatenate([p["bi"], p["bf"], p["bg"], p["bo"]], axis=1)) * gscale

    slab[R_WX:R_WX + F, :] = wx
    slab[R_WH:R_WH + H, :] = wh
    slab[R_BL, :] = bl[0]

    slab[R_HEADS:R_HEADS + FEAT, 0:V_HID] = npx(p["w1"])
    slab[R_HEADS:R_HEADS + FEAT, V_HID:V_HID + G_HID] = npx(p["wg1h"])

    slab[R_W2:R_W2 + V_HID, 0:V_HID] = npx(p["w2"])
    slab[R_W3:R_W3 + V_HID, 0:V_HID] = npx(p["w3"])

    slab[R_B1, 0:V_HID] = npx(p["b1"])[0]
    slab[R_B2, 0:V_HID] = npx(p["b2"])[0]
    slab[R_B3, 0:V_HID] = npx(p["b3"])[0]
    slab[R_BG1, V_HID:V_HID + G_HID] = npx(p["bg1"])[0]
    slab[R_WG1A, V_HID:V_HID + G_HID] = npx(p["wg1a"])[0]
    slab[R_WVT, 0:V_HID] = npx(p["wv"])[:, 0]
    slab[R_WMUT, V_HID:V_HID + G_HID] = npx(p["wmu"])[:, 0]
    slab[R_WSGT, V_HID:V_HID + G_HID] = npx(p["wsig"])[:, 0]
    slab[R_SCAL, 0] = float(p["bv"][0, 0])
    slab[R_SCAL, 1] = float(p["bmu"][0, 0])
    slab[R_SCAL, 2] = float(p["bsig"][0, 0])
    return jnp.asarray(slab)


# ----------------------------- pure-JAX reference -----------------------------
def reference_forward(s_btf, action, p, z):
    B, T, _ = s_btf.shape
    h = jnp.zeros((B, N_HIDDEN), jnp.float32)
    c = jnp.zeros((B, N_HIDDEN), jnp.float32)
    for t in range(T):
        x = s_btf[:, t, :]
        i = jax.nn.sigmoid(x @ p["wxi"] + h @ p["whi"] + p["bi"])
        f = jax.nn.sigmoid(x @ p["wxf"] + h @ p["whf"] + p["bf"])
        g = jnp.tanh(x @ p["wxg"] + h @ p["whg"] + p["bg"])
        o = jax.nn.sigmoid(x @ p["wxo"] + h @ p["who"] + p["bo"])
        c = f * c + i * g
        h = o * jnp.tanh(c)
    f1 = jax.nn.relu(h @ p["w1"] + p["b1"])
    f2 = jax.nn.relu(f1 @ p["w2"] + p["b2"])
    f3 = jax.nn.relu(f2 @ p["w3"] + p["b3"])
    value = f3 @ p["wv"] + p["bv"]
    g1 = jax.nn.relu(h @ p["wg1h"] + action @ p["wg1a"] + p["bg1"])
    mu = jnp.tanh(g1 @ p["wmu"] + p["bmu"])
    sig = jax.nn.softplus(g1 @ p["wsig"] + p["bsig"] + 1e-5)
    cgm = jnp.clip(mu + sig * z[0, 0], -1.0, 1.0)
    return value, mu, sig, cgm


# ----------------------------- main -------------------------------------------
if __name__ == "__main__":
    key = jax.random.PRNGKey(0)
    k_param, k_s, k_a, k_z = jax.random.split(key, 4)

    params = init_params(k_param)
    slab = pack_params(params)
    s = jax.random.normal(k_s, (BATCH, SEQ, N_FEATURES), jnp.float32)
    action = jax.random.normal(k_a, (BATCH, N_ACTION), jnp.float32)
    # torch.distributions.Normal(0,1).sample() -> single scalar shared by batch,
    # drawn host-side and passed in (kept outside the kernel on purpose).
    z = jax.random.normal(k_z, (1, 1), jnp.float32)

    outs = critic_forward(s, action, slab, z)
    outs = jax.block_until_ready(outs)

    refs = reference_forward(s, action, params, z)
    for o, r in zip(outs, refs):
        np.testing.assert_allclose(np.asarray(o), np.asarray(r),
                                   rtol=1e-3, atol=1e-3)

    print("KERNEL_OK")
</pallas_src>

<mosaic_0001>
module attributes {stable_mosaic.version = 11 : i64} {
  func.func @critic_kernel(%arg0: memref<19x4xf32, #tpu.memory_space<vmem>>, %arg1: memref<128x64xf32, #tpu.memory_space<vmem>>, %arg2: memref<2x4xf32, #tpu.memory_space<vmem>>) attributes {dimension_semantics = [], scalar_prefetch = 0 : i64, scratch_operands = 0 : i64, tpu.core_type = #tpu.core_type<tc>} {
    %c0 = arith.constant 0 : index
    %c0_0 = arith.constant 0 : index
    %0 = vector.load %arg1[%c0, %c0_0] : memref<128x64xf32, #tpu.memory_space<vmem>>, vector<4x64xf32>
    %c24 = arith.constant 24 : index
    %c0_1 = arith.constant 0 : index
    %1 = vector.load %arg1[%c24, %c0_1] : memref<128x64xf32, #tpu.memory_space<vmem>>, vector<1x64xf32>
    %c0_2 = arith.constant 0 : index
    %c0_3 = arith.constant 0 : index
    %2 = vector.load %arg0[%c0_2, %c0_3] : memref<19x4xf32, #tpu.memory_space<vmem>>, vector<16x4xf32>
    %cst = arith.constant dense<0.000000e+00> : vector<16x64xf32>
    %3 = tpu.matmul %2, %0, %cst {dimension_numbers = #tpu.dot_dimension_numbers<[1], [0], [0], [1], [0, 0, 1, 1], [], []>} : vector<16x4xf32>, vector<4x64xf32>, vector<16x64xf32> -> vector<16x64xf32>
    %4 = vector.broadcast %1 : vector<1x64xf32> to vector<16x64xf32>
    %5 = arith.addf %3, %4 : vector<16x64xf32>
    %6 = vector.extract_strided_slice %5 {offsets = [0, 0], sizes = [2, 64], strides = [1, 1]} : vector<16x64xf32> to vector<2x64xf32>
    %7 = vector.extract_strided_slice %5 {offsets = [2, 0], sizes = [2, 64], strides = [1, 1]} : vector<16x64xf32> to vector<2x64xf32>
    %8 = vector.extract_strided_slice %5 {offsets = [4, 0], sizes = [2, 64], strides = [1, 1]} : vector<16x64xf32> to vector<2x64xf32>
    %9 = vector.extract_strided_slice %5 {offsets = [6, 0], sizes = [2, 64], strides = [1, 1]} : vector<16x64xf32> to vector<2x64xf32>
    %10 = vector.extract_strided_slice %5 {offsets = [8, 0], sizes = [2, 64], strides = [1, 1]} : vector<16x64xf32> to vector<2x64xf32>
    %11 = vector.extract_strided_slice %5 {offsets = [10, 0], sizes = [2, 64], strides = [1, 1]} : vector<16x64xf32> to vector<2x64xf32>
    %12 = vector.extract_strided_slice %5 {offsets = [12, 0], sizes = [2, 64], strides = [1, 1]} : vector<16x64xf32> to vector<2x64xf32>
    %13 = vector.extract_strided_slice %5 {offsets = [14, 0], sizes = [2, 64], strides = [1, 1]} : vector<16x64xf32> to vector<2x64xf32>
    %c8 = arith.constant 8 : index
    %c0_4 = arith.constant 0 : index
    %14 = vector.load %arg1[%c8, %c0_4] : memref<128x64xf32, #tpu.memory_space<vmem>>, vector<1x64xf32>
    %c9 = arith.constant 9 : index
    %c0_5 = arith.constant 0 : index
    %15 = vector.load %arg1[%c9, %c0_5] : memref<128x64xf32, #tpu.memory_space<vmem>>, vector<1x64xf32>
    %c10 = arith.constant 10 : index
    %c0_6 = arith.constant 0 : index
    %16 = vector.load %arg1[%c10, %c0_6] : memref<128x64xf32, #tpu.memory_space<vmem>>, vector<1x64xf32>
    %c11 = arith.constant 11 : index
    %c0_7 = arith.constant 0 : index
    %17 = vector.load %arg1[%c11, %c0_7] : memref<128x64xf32, #tpu.memory_space<vmem>>, vector<1x64xf32>
    %c12 = arith.constant 12 : index
    %c0_8 = arith.constant 0 : index
    %18 = vector.load %arg1[%c12, %c0_8] : memref<128x64xf32, #tpu.memory_space<vmem>>, vector<1x64xf32>
    %c13 = arith.constant 13 : index
    %c0_9 = arith.constant 0 : index
    %19 = vector.load %arg1[%c13, %c0_9] : memref<128x64xf32, #tpu.memory_space<vmem>>, vector<1x64xf32>
    %c14 = arith.constant 14 : index
    %c0_10 = arith.constant 0 : index
    %20 = vector.load %arg1[%c14, %c0_10] : memref<128x64xf32, #tpu.memory_space<vmem>>, vector<1x64xf32>
    %c15 = arith.constant 15 : index
    %c0_11 = arith.constant 0 : index
    %21 = vector.load %arg1[%c15, %c0_11] : memref<128x64xf32, #tpu.memory_space<vmem>>, vector<1x64xf32>
    %c16 = arith.constant 16 : index
    %c0_12 = arith.constant 0 : index
    %22 = vector.load %arg1[%c16, %c0_12] : memref<128x64xf32, #tpu.memory_space<vmem>>, vector<1x64xf32>
    %c17 = arith.constant 17 : index
    %c0_13 = arith.constant 0 : index
    %23 = vector.load %arg1[%c17, %c0_13] : memref<128x64xf32, #tpu.memory_space<vmem>>, vector<1x64xf32>
    %c18 = arith.constant 18 : index
    %c0_14 = arith.constant 0 : index
    %24 = vector.load %arg1[%c18, %c0_14] : memref<128x64xf32, #tpu.memory_space<vmem>>, vector<1x64xf32>
    %c19 = arith.constant 19 : index
    %c0_15 = arith.constant 0 : index
    %25 = vector.load %arg1[%c19, %c0_15] : memref<128x64xf32, #tpu.memory_space<vmem>>, vector<1x64xf32>
    %c20 = arith.constant 20 : index
    %c0_16 = arith.constant 0 : index
    %26 = vector.load %arg1[%c20, %c0_16] : memref<128x64xf32, #tpu.memory_space<vmem>>, vector<1x64xf32>
    %c21 = arith.constant 21 : index
    %c0_17 = arith.constant 0 : index
    %27 = vector.load %arg1[%c21, %c0_17] : memref<128x64xf32, #tpu.memory_space<vmem>>, vector<1x64xf32>
    %c22 = arith.constant 22 : index
    %c0_18 = arith.constant 0 : index
    %28 = vector.load %arg1[%c22, %c0_18] : memref<128x64xf32, #tpu.memory_space<vmem>>, vector<1x64xf32>
    %c23 = arith.constant 23 : index
    %c0_19 = arith.constant 0 : index
    %29 = vector.load %arg1[%c23, %c0_19] : memref<128x64xf32, #tpu.memory_space<vmem>>, vector<1x64xf32>
    %cst_20 = arith.constant 0.000000e+00 : f32
    %30 = vector.broadcast %cst_20 : f32 to vector<2x16xf32>
    %cst_21 = arith.constant 0.000000e+00 : f32
    %31 = vector.broadcast %cst_21 : f32 to vector<2x16xf32>
    %32 = vector.extract_strided_slice %30 {offsets = [0, 0], sizes = [2, 1], strides = [1, 1]} : vector<2x16xf32> to vector<2x1xf32>
    %33 = vector.broadcast %32 : vector<2x1xf32> to vector<2x64xf32>
    %34 = vector.broadcast %14 : vector<1x64xf32> to vector<2x64xf32>
    %35 = arith.mulf %33, %34 : vector<2x64xf32>
    %36 = vector.extract_strided_slice %30 {offsets = [0, 1], sizes = [2, 1], strides = [1, 1]} : vector<2x16xf32> to vector<2x1xf32>
    %37 = vector.broadcast %36 : vector<2x1xf32> to vector<2x64xf32>
    %38 = vector.broadcast %15 : vector<1x64xf32> to vector<2x64xf32>
    %39 = arith.mulf %37, %38 : vector<2x64xf32>
    %40 = vector.extract_strided_slice %30 {offsets = [0, 2], sizes = [2, 1], strides = [1, 1]} : vector<2x16xf32> to vector<2x1xf32>
    %41 = vector.broadcast %40 : vector<2x1xf32> to vector<2x64xf32>
    %42 = vector.broadcast %16 : vector<1x64xf32> to vector<2x64xf32>
    %43 = arith.mulf %41, %42 : vector<2x64xf32>
    %44 = vector.extract_strided_slice %30 {offsets = [0, 3], sizes = [2, 1], strides = [1, 1]} : vector<2x16xf32> to vector<2x1xf32>
    %45 = vector.broadcast %44 : vector<2x1xf32> to vector<2x64xf32>
    %46 = vector.broadcast %17 : vector<1x64xf32> to vector<2x64xf32>
    %47 = arith.mulf %45, %46 : vector<2x64xf32>
    %48 = vector.extract_strided_slice %30 {offsets = [0, 4], sizes = [2, 1], strides = [1, 1]} : vector<2x16xf32> to vector<2x1xf32>
    %49 = vector.broadcast %48 : vector<2x1xf32> to vector<2x64xf32>
    %50 = vector.broadcast %18 : vector<1x64xf32> to vector<2x64xf32>
    %51 = arith.mulf %49, %50 : vector<2x64xf32>
    %52 = vector.extract_strided_slice %30 {offsets = [0, 5], sizes = [2, 1], strides = [1, 1]} : vector<2x16xf32> to vector<2x1xf32>
    %53 = vector.broadcast %52 : vector<2x1xf32> to vector<2x64xf32>
    %54 = vector.broadcast %19 : vector<1x64xf32> to vector<2x64xf32>
    %55 = arith.mulf %53, %54 : vector<2x64xf32>
    %56 = vector.extract_strided_slice %30 {offsets = [0, 6], sizes = [2, 1], strides = [1, 1]} : vector<2x16xf32> to vector<2x1xf32>
    %57 = vector.broadcast %56 : vector<2x1xf32> to vector<2x64xf32>
    %58 = vector.broadcast %20 : vector<1x64xf32> to vector<2x64xf32>
    %59 = arith.mulf %57, %58 : vector<2x64xf32>
    %60 = vector.extract_strided_slice %30 {offsets = [0, 7], sizes = [2, 1], strides = [1, 1]} : vector<2x16xf32> to vector<2x1xf32>
    %61 = vector.broadcast %60 : vector<2x1xf32> to vector<2x64xf32>
    %62 = vector.broadcast %21 : vector<1x64xf32> to vector<2x64xf32>
    %63 = arith.mulf %61, %62 : vector<2x64xf32>
    %64 = vector.extract_strided_slice %30 {offsets = [0, 8], sizes = [2, 1], strides = [1, 1]} : vector<2x16xf32> to vector<2x1xf32>
    %65 = vector.broadcast %64 : vector<2x1xf32> to vector<2x64xf32>
    %66 = vector.broadcast %22 : vector<1x64xf32> to vector<2x64xf32>
    %67 = arith.mulf %65, %66 : vector<2x64xf32>
    %68 = vector.extract_strided_slice %30 {offsets = [0, 9], sizes = [2, 1], strides = [1, 1]} : vector<2x16xf32> to vector<2x1xf32>
    %69 = vector.broadcast %68 : vector<2x1xf32> to vector<2x64xf32>
    %70 = vector.broadcast %23 : vector<1x64xf32> to vector<2x64xf32>
    %71 = arith.mulf %69, %70 : vector<2x64xf32>
    %72 = vector.extract_strided_slice %30 {offsets = [0, 10], sizes = [2, 1], strides = [1, 1]} : vector<2x16xf32> to vector<2x1xf32>
    %73 = vector.broadcast %72 : vector<2x1xf32> to vector<2x64xf32>
    %74 = vector.broadcast %24 : vector<1x64xf32> to vector<2x64xf32>
    %75 = arith.mulf %73, %74 : vector<2x64xf32>
    %76 = vector.extract_strided_slice %30 {offsets = [0, 11], sizes = [2, 1], strides = [1, 1]} : vector<2x16xf32> to vector<2x1xf32>
    %77 = vector.broadcast %76 : vector<2x1xf32> to vector<2x64xf32>
    %78 = vector.broadcast %25 : vector<1x64xf32> to vector<2x64xf32>
    %79 = arith.mulf %77, %78 : vector<2x64xf32>
    %80 = vector.extract_strided_slice %30 {offsets = [0, 12], sizes = [2, 1], strides = [1, 1]} : vector<2x16xf32> to vector<2x1xf32>
    %81 = vector.broadcast %80 : vector<2x1xf32> to vector<2x64xf32>
    %82 = vector.broadcast %26 : vector<1x64xf32> to vector<2x64xf32>
    %83 = arith.mulf %81, %82 : vector<2x64xf32>
    %84 = vector.extract_strided_slice %30 {offsets = [0, 13], sizes = [2, 1], strides = [1, 1]} : vector<2x16xf32> to vector<2x1xf32>
    %85 = vector.broadcast %84 : vector<2x1xf32> to vector<2x64xf32>
    %86 = vector.broadcast %27 : vector<1x64xf32> to vector<2x64xf32>
    %87 = arith.mulf %85, %86 : vector<2x64xf32>
    %88 = vector.extract_strided_slice %30 {offsets = [0, 14], sizes = [2, 1], strides = [1, 1]} : vector<2x16xf32> to vector<2x1xf32>
    %89 = vector.broadcast %88 : vector<2x1xf32> to vector<2x64xf32>
    %90 = vector.broadcast %28 : vector<1x64xf32> to vector<2x64xf32>
    %91 = arith.mulf %89, %90 : vector<2x64xf32>
    %92 = vector.extract_strided_slice %30 {offsets = [0, 15], sizes = [2, 1], strides = [1, 1]} : vector<2x16xf32> to vector<2x1xf32>
    %93 = vector.broadcast %92 : vector<2x1xf32> to vector<2x64xf32>
    %94 = vector.broadcast %29 : vector<1x64xf32> to vector<2x64xf32>
    %95 = arith.mulf %93, %94 : vector<2x64xf32>
    %96 = arith.addf %35, %39 : vector<2x64xf32>
    %97 = arith.addf %43, %47 : vector<2x64xf32>
    %98 = arith.addf %51, %55 : vector<2x64xf32>
    %99 = arith.addf %59, %63 : vector<2x64xf32>
    %100 = arith.addf %67, %71 : vector<2x64xf32>
    %101 = arith.addf %75, %79 : vector<2x64xf32>
    %102 = arith.addf %83, %87 : vector<2x64xf32>
    %103 = arith.addf %91, %95 : vector<2x64xf32>
    %104 = arith.addf %96, %97 : vector<2x64xf32>
    %105 = arith.addf %98, %99 : vector<2x64xf32>
    %106 = arith.addf %100, %101 : vector<2x64xf32>
    %107 = arith.addf %102, %103 : vector<2x64xf32>
    %108 = arith.addf %104, %105 : vector<2x64xf32>
    %109 = arith.addf %106, %107 : vector<2x64xf32>
    %110 = arith.addf %108, %109 : vector<2x64xf32>
    %111 = arith.addf %6, %110 : vector<2x64xf32>
    %cst_22 = arith.constant 5.000000e-01 : f32
    %112 = vector.broadcast %cst_22 : f32 to vector<2x64xf32>
    %113 = arith.mulf %112, %111 : vector<2x64xf32>
    %114 = math.tanh %113 : vector<2x64xf32>
    %cst_23 = arith.constant 5.000000e-01 : f32
    %115 = vector.broadcast %cst_23 : f32 to vector<2x64xf32>
    %116 = arith.mulf %115, %114 : vector<2x64xf32>
    %cst_24 = arith.constant 5.000000e-01 : f32
    %117 = vector.broadcast %cst_24 : f32 to vector<2x64xf32>
    %118 = arith.addf %116, %117 : vector<2x64xf32>
    %119 = vector.extract_strided_slice %118 {offsets = [0, 0], sizes = [2, 16], strides = [1, 1]} : vector<2x64xf32> to vector<2x16xf32>
    %120 = vector.extract_strided_slice %118 {offsets = [0, 16], sizes = [2, 16], strides = [1, 1]} : vector<2x64xf32> to vector<2x16xf32>
    %121 = vector.extract_strided_slice %114 {offsets = [0, 32], sizes = [2, 16], strides = [1, 1]} : vector<2x64xf32> to vector<2x16xf32>
    %122 = vector.extract_strided_slice %118 {offsets = [0, 48], sizes = [2, 16], strides = [1, 1]} : vector<2x64xf32> to vector<2x16xf32>
    %123 = arith.mulf %120, %31 : vector<2x16xf32>
    %124 = arith.mulf %119, %121 : vector<2x16xf32>
    %125 = arith.addf %123, %124 : vector<2x16xf32>
    %126 = math.tanh %125 : vector<2x16xf32>
    %127 = arith.mulf %122, %126 : vector<2x16xf32>
    %128 = vector.extract_strided_slice %127 {offsets = [0, 0], sizes = [2, 1], strides = [1, 1]} : vector<2x16xf32> to vector<2x1xf32>
    %129 = vector.broadcast %128 : vector<2x1xf32> to vector<2x64xf32>
    %130 = vector.broadcast %14 : vector<1x64xf32> to vector<2x64xf32>
    %131 = arith.mulf %129, %130 : vector<2x64xf32>
    %132 = vector.extract_strided_slice %127 {offsets = [0, 1], sizes = [2, 1], strides = [1, 1]} : vector<2x16xf32> to vector<2x1xf32>
    %133 = vector.broadcast %132 : vector<2x1xf32> to vector<2x64xf32>
    %134 = vector.broadcast %15 : vector<1x64xf32> to vector<2x64xf32>
    %135 = arith.mulf %133, %134 : vector<2x64xf32>
    %136 = vector.extract_strided_slice %127 {offsets = [0, 2], sizes = [2, 1], strides = [1, 1]} : vector<2x16xf32> to vector<2x1xf32>
    %137 = vector.broadcast %136 : vector<2x1xf32> to vector<2x64xf32>
    %138 = vector.broadcast %16 : vector<1x64xf32> to vector<2x64xf32>
    %139 = arith.mulf %137, %138 : vector<2x64xf32>
    %140 = vector.extract_strided_slice %127 {offsets = [0, 3], sizes = [2, 1], strides = [1, 1]} : vector<2x16xf32> to vector<2x1xf32>
    %141 = vector.broadcast %140 : vector<2x1xf32> to vector<2x64xf32>
    %142 = vector.broadcast %17 : vector<1x64xf32> to vector<2x64xf32>
    %143 = arith.mulf %141, %142 : vector<2x64xf32>
    %144 = vector.extract_strided_slice %127 {offsets = [0, 4], sizes = [2, 1], strides = [1, 1]} : vector<2x16xf32> to vector<2x1xf32>
    %145 = vector.broadcast %144 : vector<2x1xf32> to vector<2x64xf32>
    %146 = vector.broadcast %18 : vector<1x64xf32> to vector<2x64xf32>
    %147 = arith.mulf %145, %146 : vector<2x64xf32>
    %148 = vector.extract_strided_slice %127 {offsets = [0, 5], sizes = [2, 1], strides = [1, 1]} : vector<2x16xf32> to vector<2x1xf32>
    %149 = vector.broadcast %148 : vector<2x1xf32> to vector<2x64xf32>
    %150 = vector.broadcast %19 : vector<1x64xf32> to vector<2x64xf32>
    %151 = arith.mulf %149, %150 : vector<2x64xf32>
    %152 = vector.extract_strided_slice %127 {offsets = [0, 6], sizes = [2, 1], strides = [1, 1]} : vector<2x16xf32> to vector<2x1xf32>
    %153 = vector.broadcast %152 : vector<2x1xf32> to vector<2x64xf32>
    %154 = vector.broadcast %20 : vector<1x64xf32> to vector<2x64xf32>
    %155 = arith.mulf %153, %154 : vector<2x64xf32>
    %156 = vector.extract_strided_slice %127 {offsets = [0, 7], sizes = [2, 1], strides = [1, 1]} : vector<2x16xf32> to vector<2x1xf32>
    %157 = vector.broadcast %156 : vector<2x1xf32> to vector<2x64xf32>
    %158 = vector.broadcast %21 : vector<1x64xf32> to vector<2x64xf32>
    %159 = arith.mulf %157, %158 : vector<2x64xf32>
    %160 = vector.extract_strided_slice %127 {offsets = [0, 8], sizes = [2, 1], strides = [1, 1]} : vector<2x16xf32> to vector<2x1xf32>
    %161 = vector.broadcast %160 : vector<2x1xf32> to vector<2x64xf32>
    %162 = vector.broadcast %22 : vector<1x64xf32> to vector<2x64xf32>
    %163 = arith.mulf %161, %162 : vector<2x64xf32>
    %164 = vector.extract_strided_slice %127 {offsets = [0, 9], sizes = [2, 1], strides = [1, 1]} : vector<2x16xf32> to vector<2x1xf32>
    %165 = vector.broadcast %164 : vector<2x1xf32> to vector<2x64xf32>
    %166 = vector.broadcast %23 : vector<1x64xf32> to vector<2x64xf32>
    %167 = arith.mulf %165, %166 : vector<2x64xf32>
    %168 = vector.extract_strided_slice %127 {offsets = [0, 10], sizes = [2, 1], strides = [1, 1]} : vector<2x16xf32> to vector<2x1xf32>
    %169 = vector.broadcast %168 : vector<2x1xf32> to vector<2x64xf32>
    %170 = vector.broadcast %24 : vector<1x64xf32> to vector<2x64xf32>
    %171 = arith.mulf %169, %170 : vector<2x64xf32>
    %172 = vector.extract_strided_slice %127 {offsets = [0, 11], sizes = [2, 1], strides = [1, 1]} : vector<2x16xf32> to vector<2x1xf32>
    %173 = vector.broadcast %172 : vector<2x1xf32> to vector<2x64xf32>
    %174 = vector.broadcast %25 : vector<1x64xf32> to vector<2x64xf32>
    %175 = arith.mulf %173, %174 : vector<2x64xf32>
    %176 = vector.extract_strided_slice %127 {offsets = [0, 12], sizes = [2, 1], strides = [1, 1]} : vector<2x16xf32> to vector<2x1xf32>
    %177 = vector.broadcast %176 : vector<2x1xf32> to vector<2x64xf32>
    %178 = vector.broadcast %26 : vector<1x64xf32> to vector<2x64xf32>
    %179 = arith.mulf %177, %178 : vector<2x64xf32>
    %180 = vector.extract_strided_slice %127 {offsets = [0, 13], sizes = [2, 1], strides = [1, 1]} : vector<2x16xf32> to vector<2x1xf32>
    %181 = vector.broadcast %180 : vector<2x1xf32> to vector<2x64xf32>
    %182 = vector.broadcast %27 : vector<1x64xf32> to vector<2x64xf32>
    %183 = arith.mulf %181, %182 : vector<2x64xf32>
    %184 = vector.extract_strided_slice %127 {offsets = [0, 14], sizes = [2, 1], strides = [1, 1]} : vector<2x16xf32> to vector<2x1xf32>
    %185 = vector.broadcast %184 : vector<2x1xf32> to vector<2x64xf32>
    %186 = vector.broadcast %28 : vector<1x64xf32> to vector<2x64xf32>
    %187 = arith.mulf %185, %186 : vector<2x64xf32>
    %188 = vector.extract_strided_slice %127 {offsets = [0, 15], sizes = [2, 1], strides = [1, 1]} : vector<2x16xf32> to vector<2x1xf32>
    %189 = vector.broadcast %188 : vector<2x1xf32> to vector<2x64xf32>
    %190 = vector.broadcast %29 : vector<1x64xf32> to vector<2x64xf32>
    %191 = arith.mulf %189, %190 : vector<2x64xf32>
    %192 = arith.addf %131, %135 : vector<2x64xf32>
    %193 = arith.addf %139, %143 : vector<2x64xf32>
    %194 = arith.addf %147, %151 : vector<2x64xf32>
    %195 = arith.addf %155, %159 : vector<2x64xf32>
    %196 = arith.addf %163, %167 : vector<2x64xf32>
    %197 = arith.addf %171, %175 : vector<2x64xf32>
    %198 = arith.addf %179, %183 : vector<2x64xf32>
    %199 = arith.addf %187, %191 : vector<2x64xf32>
    %200 = arith.addf %192, %193 : vector<2x64xf32>
    %201 = arith.addf %194, %195 : vector<2x64xf32>
    %202 = arith.addf %196, %197 : vector<2x64xf32>
    %203 = arith.addf %198, %199 : vector<2x64xf32>
    %204 = arith.addf %200, %201 : vector<2x64xf32>
    %205 = arith.addf %202, %203 : vector<2x64xf32>
    %206 = arith.addf %204, %205 : vector<2x64xf32>
    %207 = arith.addf %7, %206 : vector<2x64xf32>
    %cst_25 = arith.constant 5.000000e-01 : f32
    %208 = vector.broadcast %cst_25 : f32 to vector<2x64xf32>
    %209 = arith.mulf %208, %207 : vector<2x64xf32>
    %210 = math.tanh %209 : vector<2x64xf32>
    %cst_26 = arith.constant 5.000000e-01 : f32
    %211 = vector.broadcast %cst_26 : f32 to vector<2x64xf32>
    %212 = arith.mulf %211, %210 : vector<2x64xf32>
    %cst_27 = arith.constant 5.000000e-01 : f32
    %213 = vector.broadcast %cst_27 : f32 to vector<2x64xf32>
    %214 = arith.addf %212, %213 : vector<2x64xf32>
    %215 = vector.extract_strided_slice %214 {offsets = [0, 0], sizes = [2, 16], strides = [1, 1]} : vector<2x64xf32> to vector<2x16xf32>
    %216 = vector.extract_strided_slice %214 {offsets = [0, 16], sizes = [2, 16], strides = [1, 1]} : vector<2x64xf32> to vector<2x16xf32>
    %217 = vector.extract_strided_slice %210 {offsets = [0, 32], sizes = [2, 16], strides = [1, 1]} : vector<2x64xf32> to vector<2x16xf32>
    %218 = vector.extract_strided_slice %214 {offsets = [0, 48], sizes = [2, 16], strides = [1, 1]} : vector<2x64xf32> to vector<2x16xf32>
    %219 = arith.mulf %216, %125 : vector<2x16xf32>
    %220 = arith.mulf %215, %217 : vector<2x16xf32>
    %221 = arith.addf %219, %220 : vector<2x16xf32>
    %222 = math.tanh %221 : vector<2x16xf32>
    %223 = arith.mulf %218, %222 : vector<2x16xf32>
    %224 = vector.extract_strided_slice %223 {offsets = [0, 0], sizes = [2, 1], strides = [1, 1]} : vector<2x16xf32> to vector<2x1xf32>
    %225 = vector.broadcast %224 : vector<2x1xf32> to vector<2x64xf32>
    %226 = vector.broadcast %14 : vector<1x64xf32> to vector<2x64xf32>
    %227 = arith.mulf %225, %226 : vector<2x64xf32>
    %228 = vector.extract_strided_slice %223 {offsets = [0, 1], sizes = [2, 1], strides = [1, 1]} : vector<2x16xf32> to vector<2x1xf32>
    %229 = vector.broadcast %228 : vector<2x1xf32> to vector<2x64xf32>
    %230 = vector.broadcast %15 : vector<1x64xf32> to vector<2x64xf32>
    %231 = arith.mulf %229, %230 : vector<2x64xf32>
    %232 = vector.extract_strided_slice %223 {offsets = [0, 2], sizes = [2, 1], strides = [1, 1]} : vector<2x16xf32> to vector<2x1xf32>
    %233 = vector.broadcast %232 : vector<2x1xf32> to vector<2x64xf32>
    %234 = vector.broadcast %16 : vector<1x64xf32> to vector<2x64xf32>
    %235 = arith.mulf %233, %234 : vector<2x64xf32>
    %236 = vector.extract_strided_slice %223 {offsets = [0, 3], sizes = [2, 1], strides = [1, 1]} : vector<2x16xf32> to vector<2x1xf32>
    %237 = vector.broadcast %236 : vector<2x1xf32> to vector<2x64xf32>
    %238 = vector.broadcast %17 : vector<1x64xf32> to vector<2x64xf32>
    %239 = arith.mulf %237, %238 : vector<2x64xf32>
    %240 = vector.extract_strided_slice %223 {offsets = [0, 4], sizes = [2, 1], strides = [1, 1]} : vector<2x16xf32> to vector<2x1xf32>
    %241 = vector.broadcast %240 : vector<2x1xf32> to vector<2x64xf32>
    %242 = vector.broadcast %18 : vector<1x64xf32> to vector<2x64xf32>
    %243 = arith.mulf %241, %242 : vector<2x64xf32>
    %244 = vector.extract_strided_slice %223 {offsets = [0, 5], sizes = [2, 1], strides = [1, 1]} : vector<2x16xf32> to vector<2x1xf32>
    %245 = vector.broadcast %244 : vector<2x1xf32> to vector<2x64xf32>
    %246 = vector.broadcast %19 : vector<1x64xf32> to vector<2x64xf32>
    %247 = arith.mulf %245, %246 : vector<2x64xf32>
    %248 = vector.extract_strided_slice %223 {offsets = [0, 6], sizes = [2, 1], strides = [1, 1]} : vector<2x16xf32> to vector<2x1xf32>
    %249 = vector.broadcast %248 : vector<2x1xf32> to vector<2x64xf32>
    %250 = vector.broadcast %20 : vector<1x64xf32> to vector<2x64xf32>
    %251 = arith.mulf %249, %250 : vector<2x64xf32>
    %252 = vector.extract_strided_slice %223 {offsets = [0, 7], sizes = [2, 1], strides = [1, 1]} : vector<2x16xf32> to vector<2x1xf32>
    %253 = vector.broadcast %252 : vector<2x1xf32> to vector<2x64xf32>
    %254 = vector.broadcast %21 : vector<1x64xf32> to vector<2x64xf32>
    %255 = arith.mulf %253, %254 : vector<2x64xf32>
    %256 = vector.extract_strided_slice %223 {offsets = [0, 8], sizes = [2, 1], strides = [1, 1]} : vector<2x16xf32> to vector<2x1xf32>
    %257 = vector.broadcast %256 : vector<2x1xf32> to vector<2x64xf32>
    %258 = vector.broadcast %22 : vector<1x64xf32> to vector<2x64xf32>
    %259 = arith.mulf %257, %258 : vector<2x64xf32>
    %260 = vector.extract_strided_slice %223 {offsets = [0, 9], sizes = [2, 1], strides = [1, 1]} : vector<2x16xf32> to vector<2x1xf32>
    %261 = vector.broadcast %260 : vector<2x1xf32> to vector<2x64xf32>
    %262 = vector.broadcast %23 : vector<1x64xf32> to vector<2x64xf32>
    %263 = arith.mulf %261, %262 : vector<2x64xf32>
    %264 = vector.extract_strided_slice %223 {offsets = [0, 10], sizes = [2, 1], strides = [1, 1]} : vector<2x16xf32> to vector<2x1xf32>
    %265 = vector.broadcast %264 : vector<2x1xf32> to vector<2x64xf32>
    %266 = vector.broadcast %24 : vector<1x64xf32> to vector<2x64xf32>
    %267 = arith.mulf %265, %266 : vector<2x64xf32>
    %268 = vector.extract_strided_slice %223 {offsets = [0, 11], sizes = [2, 1], strides = [1, 1]} : vector<2x16xf32> to vector<2x1xf32>
    %269 = vector.broadcast %268 : vector<2x1xf32> to vector<2x64xf32>
    %270 = vector.broadcast %25 : vector<1x64xf32> to vector<2x64xf32>
    %271 = arith.mulf %269, %270 : vector<2x64xf32>
    %272 = vector.extract_strided_slice %223 {offsets = [0, 12], sizes = [2, 1], strides = [1, 1]} : vector<2x16xf32> to vector<2x1xf32>
    %273 = vector.broadcast %272 : vector<2x1xf32> to vector<2x64xf32>
    %274 = vector.broadcast %26 : vector<1x64xf32> to vector<2x64xf32>
    %275 = arith.mulf %273, %274 : vector<2x64xf32>
    %276 = vector.extract_strided_slice %223 {offsets = [0, 13], sizes = [2, 1], strides = [1, 1]} : vector<2x16xf32> to vector<2x1xf32>
    %277 = vector.broadcast %276 : vector<2x1xf32> to vector<2x64xf32>
    %278 = vector.broadcast %27 : vector<1x64xf32> to vector<2x64xf32>
    %279 = arith.mulf %277, %278 : vector<2x64xf32>
    %280 = vector.extract_strided_slice %223 {offsets = [0, 14], sizes = [2, 1], strides = [1, 1]} : vector<2x16xf32> to vector<2x1xf32>
    %281 = vector.broadcast %280 : vector<2x1xf32> to vector<2x64xf32>
    %282 = vector.broadcast %28 : vector<1x64xf32> to vector<2x64xf32>
    %283 = arith.mulf %281, %282 : vector<2x64xf32>
    %284 = vector.extract_strided_slice %223 {offsets = [0, 15], sizes = [2, 1], strides = [1, 1]} : vector<2x16xf32> to vector<2x1xf32>
    %285 = vector.broadcast %284 : vector<2x1xf32> to vector<2x64xf32>
    %286 = vector.broadcast %29 : vector<1x64xf32> to vector<2x64xf32>
    %287 = arith.mulf %285, %286 : vector<2x64xf32>
    %288 = arith.addf %227, %231 : vector<2x64xf32>
    %289 = arith.addf %235, %239 : vector<2x64xf32>
    %290 = arith.addf %243, %247 : vector<2x64xf32>
    %291 = arith.addf %251, %255 : vector<2x64xf32>
    %292 = arith.addf %259, %263 : vector<2x64xf32>
    %293 = arith.addf %267, %271 : vector<2x64xf32>
    %294 = arith.addf %275, %279 : vector<2x64xf32>
    %295 = arith.addf %283, %287 : vector<2x64xf32>
    %296 = arith.addf %288, %289 : vector<2x64xf32>
    %297 = arith.addf %290, %291 : vector<2x64xf32>
    %298 = arith.addf %292, %293 : vector<2x64xf32>
    %299 = arith.addf %294, %295 : vector<2x64xf32>
    %300 = arith.addf %296, %297 : vector<2x64xf32>
    %301 = arith.addf %298, %299 : vector<2x64xf32>
    %302 = arith.addf %300, %301 : vector<2x64xf32>
    %303 = arith.addf %8, %302 : vector<2x64xf32>
    %cst_28 = arith.constant 5.000000e-01 : f32
    %304 = vector.broadcast %cst_28 : f32 to vector<2x64xf32>
    %305 = arith.mulf %304, %303 : vector<2x64xf32>
    %306 = math.tanh %305 : vector<2x64xf32>
    %cst_29 = arith.constant 5.000000e-01 : f32
    %307 = vector.broadcast %cst_29 : f32 to vector<2x64xf32>
    %308 = arith.mulf %307, %306 : vector<2x64xf32>
    %cst_30 = arith.constant 5.000000e-01 : f32
    %309 = vector.broadcast %cst_30 : f32 to vector<2x64xf32>
    %310 = arith.addf %308, %309 : vector<2x64xf32>
    %311 = vector.extract_strided_slice %310 {offsets = [0, 0], sizes = [2, 16], strides = [1, 1]} : vector<2x64xf32> to vector<2x16xf32>
    %312 = vector.extract_strided_slice %310 {offsets = [0, 16], sizes = [2, 16], strides = [1, 1]} : vector<2x64xf32> to vector<2x16xf32>
    %313 = vector.extract_strided_slice %306 {offsets = [0, 32], sizes = [2, 16], strides = [1, 1]} : vector<2x64xf32> to vector<2x16xf32>
    %314 = vector.extract_strided_slice %310 {offsets = [0, 48], sizes = [2, 16], strides = [1, 1]} : vector<2x64xf32> to vector<2x16xf32>
    %315 = arith.mulf %312, %221 : vector<2x16xf32>
    %316 = arith.mulf %311, %313 : vector<2x16xf32>
    %317 = arith.addf %315, %316 : vector<2x16xf32>
    %318 = math.tanh %317 : vector<2x16xf32>
    %319 = arith.mulf %314, %318 : vector<2x16xf32>
    %320 = vector.extract_strided_slice %319 {offsets = [0, 0], sizes = [2, 1], strides = [1, 1]} : vector<2x16xf32> to vector<2x1xf32>
    %321 = vector.broadcast %320 : vector<2x1xf32> to vector<2x64xf32>
    %322 = vector.broadcast %14 : vector<1x64xf32> to vector<2x64xf32>
    %323 = arith.mulf %321, %322 : vector<2x64xf32>
    %324 = vector.extract_strided_slice %319 {offsets = [0, 1], sizes = [2, 1], strides = [1, 1]} : vector<2x16xf32> to vector<2x1xf32>
    %325 = vector.broadcast %324 : vector<2x1xf32> to vector<2x64xf32>
    %326 = vector.broadcast %15 : vector<1x64xf32> to vector<2x64xf32>
    %327 = arith.mulf %325, %326 : vector<2x64xf32>
    %328 = vector.extract_strided_slice %319 {offsets = [0, 2], sizes = [2, 1], strides = [1, 1]} : vector<2x16xf32> to vector<2x1xf32>
    %329 = vector.broadcast %328 : vector<2x1xf32> to vector<2x64xf32>
    %330 = vector.broadcast %16 : vector<1x64xf32> to vector<2x64xf32>
    %331 = arith.mulf %329, %330 : vector<2x64xf32>
    %332 = vector.extract_strided_slice %319 {offsets = [0, 3], sizes = [2, 1], strides = [1, 1]} : vector<2x16xf32> to vector<2x1xf32>
    %333 = vector.broadcast %332 : vector<2x1xf32> to vector<2x64xf32>
    %334 = vector.broadcast %17 : vector<1x64xf32> to vector<2x64xf32>
    %335 = arith.mulf %333, %334 : vector<2x64xf32>
    %336 = vector.extract_strided_slice %319 {offsets = [0, 4], sizes = [2, 1], strides = [1, 1]} : vector<2x16xf32> to vector<2x1xf32>
    %337 = vector.broadcast %336 : vector<2x1xf32> to vector<2x64xf32>
    %338 = vector.broadcast %18 : vector<1x64xf32> to vector<2x64xf32>
    %339 = arith.mulf %337, %338 : vector<2x64xf32>
    %340 = vector.extract_strided_slice %319 {offsets = [0, 5], sizes = [2, 1], strides = [1, 1]} : vector<2x16xf32> to vector<2x1xf32>
    %341 = vector.broadcast %340 : vector<2x1xf32> to vector<2x64xf32>
    %342 = vector.broadcast %19 : vector<1x64xf32> to vector<2x64xf32>
    %343 = arith.mulf %341, %342 : vector<2x64xf32>
    %344 = vector.extract_strided_slice %319 {offsets = [0, 6], sizes = [2, 1], strides = [1, 1]} : vector<2x16xf32> to vector<2x1xf32>
    %345 = vector.broadcast %344 : vector<2x1xf32> to vector<2x64xf32>
    %346 = vector.broadcast %20 : vector<1x64xf32> to vector<2x64xf32>
    %347 = arith.mulf %345, %346 : vector<2x64xf32>
    %348 = vector.extract_strided_slice %319 {offsets = [0, 7], sizes = [2, 1], strides = [1, 1]} : vector<2x16xf32> to vector<2x1xf32>
    %349 = vector.broadcast %348 : vector<2x1xf32> to vector<2x64xf32>
    %350 = vector.broadcast %21 : vector<1x64xf32> to vector<2x64xf32>
    %351 = arith.mulf %349, %350 : vector<2x64xf32>
    %352 = vector.extract_strided_slice %319 {offsets = [0, 8], sizes = [2, 1], strides = [1, 1]} : vector<2x16xf32> to vector<2x1xf32>
    %353 = vector.broadcast %352 : vector<2x1xf32> to vector<2x64xf32>
    %354 = vector.broadcast %22 : vector<1x64xf32> to vector<2x64xf32>
    %355 = arith.mulf %353, %354 : vector<2x64xf32>
    %356 = vector.extract_strided_slice %319 {offsets = [0, 9], sizes = [2, 1], strides = [1, 1]} : vector<2x16xf32> to vector<2x1xf32>
    %357 = vector.broadcast %356 : vector<2x1xf32> to vector<2x64xf32>
    %358 = vector.broadcast %23 : vector<1x64xf32> to vector<2x64xf32>
    %359 = arith.mulf %357, %358 : vector<2x64xf32>
    %360 = vector.extract_strided_slice %319 {offsets = [0, 10], sizes = [2, 1], strides = [1, 1]} : vector<2x16xf32> to vector<2x1xf32>
    %361 = vector.broadcast %360 : vector<2x1xf32> to vector<2x64xf32>
    %362 = vector.broadcast %24 : vector<1x64xf32> to vector<2x64xf32>
    %363 = arith.mulf %361, %362 : vector<2x64xf32>
    %364 = vector.extract_strided_slice %319 {offsets = [0, 11], sizes = [2, 1], strides = [1, 1]} : vector<2x16xf32> to vector<2x1xf32>
    %365 = vector.broadcast %364 : vector<2x1xf32> to vector<2x64xf32>
    %366 = vector.broadcast %25 : vector<1x64xf32> to vector<2x64xf32>
    %367 = arith.mulf %365, %366 : vector<2x64xf32>
    %368 = vector.extract_strided_slice %319 {offsets = [0, 12], sizes = [2, 1], strides = [1, 1]} : vector<2x16xf32> to vector<2x1xf32>
    %369 = vector.broadcast %368 : vector<2x1xf32> to vector<2x64xf32>
    %370 = vector.broadcast %26 : vector<1x64xf32> to vector<2x64xf32>
    %371 = arith.mulf %369, %370 : vector<2x64xf32>
    %372 = vector.extract_strided_slice %319 {offsets = [0, 13], sizes = [2, 1], strides = [1, 1]} : vector<2x16xf32> to vector<2x1xf32>
    %373 = vector.broadcast %372 : vector<2x1xf32> to vector<2x64xf32>
    %374 = vector.broadcast %27 : vector<1x64xf32> to vector<2x64xf32>
    %375 = arith.mulf %373, %374 : vector<2x64xf32>
    %376 = vector.extract_strided_slice %319 {offsets = [0, 14], sizes = [2, 1], strides = [1, 1]} : vector<2x16xf32> to vector<2x1xf32>
    %377 = vector.broadcast %376 : vector<2x1xf32> to vector<2x64xf32>
    %378 = vector.broadcast %28 : vector<1x64xf32> to vector<2x64xf32>
    %379 = arith.mulf %377, %378 : vector<2x64xf32>
    %380 = vector.extract_strided_slice %319 {offsets = [0, 15], sizes = [2, 1], strides = [1, 1]} : vector<2x16xf32> to vector<2x1xf32>
    %381 = vector.broadcast %380 : vector<2x1xf32> to vector<2x64xf32>
    %382 = vector.broadcast %29 : vector<1x64xf32> to vector<2x64xf32>
    %383 = arith.mulf %381, %382 : vector<2x64xf32>
    %384 = arith.addf %323, %327 : vector<2x64xf32>
    %385 = arith.addf %331, %335 : vector<2x64xf32>
    %386 = arith.addf %339, %343 : vector<2x64xf32>
    %387 = arith.addf %347, %351 : vector<2x64xf32>
    %388 = arith.addf %355, %359 : vector<2x64xf32>
    %389 = arith.addf %363, %367 : vector<2x64xf32>
    %390 = arith.addf %371, %375 : vector<2x64xf32>
    %391 = arith.addf %379, %383 : vector<2x64xf32>
    %392 = arith.addf %384, %385 : vector<2x64xf32>
    %393 = arith.addf %386, %387 : vector<2x64xf32>
    %394 = arith.addf %388, %389 : vector<2x64xf32>
    %395 = arith.addf %390, %391 : vector<2x64xf32>
    %396 = arith.addf %392, %393 : vector<2x64xf32>
    %397 = arith.addf %394, %395 : vector<2x64xf32>
    %398 = arith.addf %396, %397 : vector<2x64xf32>
    %399 = arith.addf %9, %398 : vector<2x64xf32>
    %cst_31 = arith.constant 5.000000e-01 : f32
    %400 = vector.broadcast %cst_31 : f32 to vector<2x64xf32>
    %401 = arith.mulf %400, %399 : vector<2x64xf32>
    %402 = math.tanh %401 : vector<2x64xf32>
    %cst_32 = arith.constant 5.000000e-01 : f32
    %403 = vector.broadcast %cst_32 : f32 to vector<2x64xf32>
    %404 = arith.mulf %403, %402 : vector<2x64xf32>
    %cst_33 = arith.constant 5.000000e-01 : f32
    %405 = vector.broadcast %cst_33 : f32 to vector<2x64xf32>
    %406 = arith.addf %404, %405 : vector<2x64xf32>
    %407 = vector.extract_strided_slice %406 {offsets = [0, 0], sizes = [2, 16], strides = [1, 1]} : vector<2x64xf32> to vector<2x16xf32>
    %408 = vector.extract_strided_slice %406 {offsets = [0, 16], sizes = [2, 16], strides = [1, 1]} : vector<2x64xf32> to vector<2x16xf32>
    %409 = vector.extract_strided_slice %402 {offsets = [0, 32], sizes = [2, 16], strides = [1, 1]} : vector<2x64xf32> to vector<2x16xf32>
    %410 = vector.extract_strided_slice %406 {offsets = [0, 48], sizes = [2, 16], strides = [1, 1]} : vector<2x64xf32> to vector<2x16xf32>
    %411 = arith.mulf %408, %317 : vector<2x16xf32>
    %412 = arith.mulf %407, %409 : vector<2x16xf32>
    %413 = arith.addf %411, %412 : vector<2x16xf32>
    %414 = math.tanh %413 : vector<2x16xf32>
    %415 = arith.mulf %410, %414 : vector<2x16xf32>
    %416 = vector.extract_strided_slice %415 {offsets = [0, 0], sizes = [2, 1], strides = [1, 1]} : vector<2x16xf32> to vector<2x1xf32>
    %417 = vector.broadcast %416 : vector<2x1xf32> to vector<2x64xf32>
    %418 = vector.broadcast %14 : vector<1x64xf32> to vector<2x64xf32>
    %419 = arith.mulf %417, %418 : vector<2x64xf32>
    %420 = vector.extract_strided_slice %415 {offsets = [0, 1], sizes = [2, 1], strides = [1, 1]} : vector<2x16xf32> to vector<2x1xf32>
    %421 = vector.broadcast %420 : vector<2x1xf32> to vector<2x64xf32>
    %422 = vector.broadcast %15 : vector<1x64xf32> to vector<2x64xf32>
    %423 = arith.mulf %421, %422 : vector<2x64xf32>
    %424 = vector.extract_strided_slice %415 {offsets = [0, 2], sizes = [2, 1], strides = [1, 1]} : vector<2x16xf32> to vector<2x1xf32>
    %425 = vector.broadcast %424 : vector<2x1xf32> to vector<2x64xf32>
    %426 = vector.broadcast %16 : vector<1x64xf32> to vector<2x64xf32>
    %427 = arith.mulf %425, %426 : vector<2x64xf32>
    %428 = vector.extract_strided_slice %415 {offsets = [0, 3], sizes = [2, 1], strides = [1, 1]} : vector<2x16xf32> to vector<2x1xf32>
    %429 = vector.broadcast %428 : vector<2x1xf32> to vector<2x64xf32>
    %430 = vector.broadcast %17 : vector<1x64xf32> to vector<2x64xf32>
    %431 = arith.mulf %429, %430 : vector<2x64xf32>
    %432 = vector.extract_strided_slice %415 {offsets = [0, 4], sizes = [2, 1], strides = [1, 1]} : vector<2x16xf32> to vector<2x1xf32>
    %433 = vector.broadcast %432 : vector<2x1xf32> to vector<2x64xf32>
    %434 = vector.broadcast %18 : vector<1x64xf32> to vector<2x64xf32>
    %435 = arith.mulf %433, %434 : vector<2x64xf32>
    %436 = vector.extract_strided_slice %415 {offsets = [0, 5], sizes = [2, 1], strides = [1, 1]} : vector<2x16xf32> to vector<2x1xf32>
    %437 = vector.broadcast %436 : vector<2x1xf32> to vector<2x64xf32>
    %438 = vector.broadcast %19 : vector<1x64xf32> to vector<2x64xf32>
    %439 = arith.mulf %437, %438 : vector<2x64xf32>
    %440 = vector.extract_strided_slice %415 {offsets = [0, 6], sizes = [2, 1], strides = [1, 1]} : vector<2x16xf32> to vector<2x1xf32>
    %441 = vector.broadcast %440 : vector<2x1xf32> to vector<2x64xf32>
    %442 = vector.broadcast %20 : vector<1x64xf32> to vector<2x64xf32>
    %443 = arith.mulf %441, %442 : vector<2x64xf32>
    %444 = vector.extract_strided_slice %415 {offsets = [0, 7], sizes = [2, 1], strides = [1, 1]} : vector<2x16xf32> to vector<2x1xf32>
    %445 = vector.broadcast %444 : vector<2x1xf32> to vector<2x64xf32>
    %446 = vector.broadcast %21 : vector<1x64xf32> to vector<2x64xf32>
    %447 = arith.mulf %445, %446 : vector<2x64xf32>
    %448 = vector.extract_strided_slice %415 {offsets = [0, 8], sizes = [2, 1], strides = [1, 1]} : vector<2x16xf32> to vector<2x1xf32>
    %449 = vector.broadcast %448 : vector<2x1xf32> to vector<2x64xf32>
    %450 = vector.broadcast %22 : vector<1x64xf32> to vector<2x64xf32>
    %451 = arith.mulf %449, %450 : vector<2x64xf32>
    %452 = vector.extract_strided_slice %415 {offsets = [0, 9], sizes = [2, 1], strides = [1, 1]} : vector<2x16xf32> to vector<2x1xf32>
    %453 = vector.broadcast %452 : vector<2x1xf32> to vector<2x64xf32>
    %454 = vector.broadcast %23 : vector<1x64xf32> to vector<2x64xf32>
    %455 = arith.mulf %453, %454 : vector<2x64xf32>
    %456 = vector.extract_strided_slice %415 {offsets = [0, 10], sizes = [2, 1], strides = [1, 1]} : vector<2x16xf32> to vector<2x1xf32>
    %457 = vector.broadcast %456 : vector<2x1xf32> to vector<2x64xf32>
    %458 = vector.broadcast %24 : vector<1x64xf32> to vector<2x64xf32>
    %459 = arith.mulf %457, %458 : vector<2x64xf32>
    %460 = vector.extract_strided_slice %415 {offsets = [0, 11], sizes = [2, 1], strides = [1, 1]} : vector<2x16xf32> to vector<2x1xf32>
    %461 = vector.broadcast %460 : vector<2x1xf32> to vector<2x64xf32>
    %462 = vector.broadcast %25 : vector<1x64xf32> to vector<2x64xf32>
    %463 = arith.mulf %461, %462 : vector<2x64xf32>
    %464 = vector.extract_strided_slice %415 {offsets = [0, 12], sizes = [2, 1], strides = [1, 1]} : vector<2x16xf32> to vector<2x1xf32>
    %465 = vector.broadcast %464 : vector<2x1xf32> to vector<2x64xf32>
    %466 = vector.broadcast %26 : vector<1x64xf32> to vector<2x64xf32>
    %467 = arith.mulf %465, %466 : vector<2x64xf32>
    %468 = vector.extract_strided_slice %415 {offsets = [0, 13], sizes = [2, 1], strides = [1, 1]} : vector<2x16xf32> to vector<2x1xf32>
    %469 = vector.broadcast %468 : vector<2x1xf32> to vector<2x64xf32>
    %470 = vector.broadcast %27 : vector<1x64xf32> to vector<2x64xf32>
    %471 = arith.mulf %469, %470 : vector<2x64xf32>
    %472 = vector.extract_strided_slice %415 {offsets = [0, 14], sizes = [2, 1], strides = [1, 1]} : vector<2x16xf32> to vector<2x1xf32>
    %473 = vector.broadcast %472 : vector<2x1xf32> to vector<2x64xf32>
    %474 = vector.broadcast %28 : vector<1x64xf32> to vector<2x64xf32>
    %475 = arith.mulf %473, %474 : vector<2x64xf32>
    %476 = vector.extract_strided_slice %415 {offsets = [0, 15], sizes = [2, 1], strides = [1, 1]} : vector<2x16xf32> to vector<2x1xf32>
    %477 = vector.broadcast %476 : vector<2x1xf32> to vector<2x64xf32>
    %478 = vector.broadcast %29 : vector<1x64xf32> to vector<2x64xf32>
    %479 = arith.mulf %477, %478 : vector<2x64xf32>
    %480 = arith.addf %419, %423 : vector<2x64xf32>
    %481 = arith.addf %427, %431 : vector<2x64xf32>
    %482 = arith.addf %435, %439 : vector<2x64xf32>
    %483 = arith.addf %443, %447 : vector<2x64xf32>
    %484 = arith.addf %451, %455 : vector<2x64xf32>
    %485 = arith.addf %459, %463 : vector<2x64xf32>
    %486 = arith.addf %467, %471 : vector<2x64xf32>
    %487 = arith.addf %475, %479 : vector<2x64xf32>
    %488 = arith.addf %480, %481 : vector<2x64xf32>
    %489 = arith.addf %482, %483 : vector<2x64xf32>
    %490 = arith.addf %484, %485 : vector<2x64xf32>
    %491 = arith.addf %486, %487 : vector<2x64xf32>
    %492 = arith.addf %488, %489 : vector<2x64xf32>
    %493 = arith.addf %490, %491 : vector<2x64xf32>
    %494 = arith.addf %492, %493 : vector<2x64xf32>
    %495 = arith.addf %10, %494 : vector<2x64xf32>
    %cst_34 = arith.constant 5.000000e-01 : f32
    %496 = vector.broadcast %cst_34 : f32 to vector<2x64xf32>
    %497 = arith.mulf %496, %495 : vector<2x64xf32>
    %498 = math.tanh %497 : vector<2x64xf32>
    %cst_35 = arith.constant 5.000000e-01 : f32
    %499 = vector.broadcast %cst_35 : f32 to vector<2x64xf32>
    %500 = arith.mulf %499, %498 : vector<2x64xf32>
    %cst_36 = arith.constant 5.000000e-01 : f32
    %501 = vector.broadcast %cst_36 : f32 to vector<2x64xf32>
    %502 = arith.addf %500, %501 : vector<2x64xf32>
    %503 = vector.extract_strided_slice %502 {offsets = [0, 0], sizes = [2, 16], strides = [1, 1]} : vector<2x64xf32> to vector<2x16xf32>
    %504 = vector.extract_strided_slice %502 {offsets = [0, 16], sizes = [2, 16], strides = [1, 1]} : vector<2x64xf32> to vector<2x16xf32>
    %505 = vector.extract_strided_slice %498 {offsets = [0, 32], sizes = [2, 16], strides = [1, 1]} : vector<2x64xf32> to vector<2x16xf32>
    %506 = vector.extract_strided_slice %502 {offsets = [0, 48], sizes = [2, 16], strides = [1, 1]} : vector<2x64xf32> to vector<2x16xf32>
    %507 = arith.mulf %504, %413 : vector<2x16xf32>
    %508 = arith.mulf %503, %505 : vector<2x16xf32>
    %509 = arith.addf %507, %508 : vector<2x16xf32>
    %510 = math.tanh %509 : vector<2x16xf32>
    %511 = arith.mulf %506, %510 : vector<2x16xf32>
    %512 = vector.extract_strided_slice %511 {offsets = [0, 0], sizes = [2, 1], strides = [1, 1]} : vector<2x16xf32> to vector<2x1xf32>
    %513 = vector.broadcast %512 : vector<2x1xf32> to vector<2x64xf32>
    %514 = vector.broadcast %14 : vector<1x64xf32> to vector<2x64xf32>
    %515 = arith.mulf %513, %514 : vector<2x64xf32>
    %516 = vector.extract_strided_slice %511 {offsets = [0, 1], sizes = [2, 1], strides = [1, 1]} : vector<2x16xf32> to vector<2x1xf32>
    %517 = vector.broadcast %516 : vector<2x1xf32> to vector<2x64xf32>
    %518 = vector.broadcast %15 : vector<1x64xf32> to vector<2x64xf32>
    %519 = arith.mulf %517, %518 : vector<2x64xf32>
    %520 = vector.extract_strided_slice %511 {offsets = [0, 2], sizes = [2, 1], strides = [1, 1]} : vector<2x16xf32> to vector<2x1xf32>
    %521 = vector.broadcast %520 : vector<2x1xf32> to vector<2x64xf32>
    %522 = vector.broadcast %16 : vector<1x64xf32> to vector<2x64xf32>
    %523 = arith.mulf %521, %522 : vector<2x64xf32>
    %524 = vector.extract_strided_slice %511 {offsets = [0, 3], sizes = [2, 1], strides = [1, 1]} : vector<2x16xf32> to vector<2x1xf32>
    %525 = vector.broadcast %524 : vector<2x1xf32> to vector<2x64xf32>
    %526 = vector.broadcast %17 : vector<1x64xf32> to vector<2x64xf32>
    %527 = arith.mulf %525, %526 : vector<2x64xf32>
    %528 = vector.extract_strided_slice %511 {offsets = [0, 4], sizes = [2, 1], strides = [1, 1]} : vector<2x16xf32> to vector<2x1xf32>
    %529 = vector.broadcast %528 : vector<2x1xf32> to vector<2x64xf32>
    %530 = vector.broadcast %18 : vector<1x64xf32> to vector<2x64xf32>
    %531 = arith.mulf %529, %530 : vector<2x64xf32>
    %532 = vector.extract_strided_slice %511 {offsets = [0, 5], sizes = [2, 1], strides = [1, 1]} : vector<2x16xf32> to vector<2x1xf32>
    %533 = vector.broadcast %532 : vector<2x1xf32> to vector<2x64xf32>
    %534 = vector.broadcast %19 : vector<1x64xf32> to vector<2x64xf32>
    %535 = arith.mulf %533, %534 : vector<2x64xf32>
    %536 = vector.extract_strided_slice %511 {offsets = [0, 6], sizes = [2, 1], strides = [1, 1]} : vector<2x16xf32> to vector<2x1xf32>
    %537 = vector.broadcast %536 : vector<2x1xf32> to vector<2x64xf32>
    %538 = vector.broadcast %20 : vector<1x64xf32> to vector<2x64xf32>
    %539 = arith.mulf %537, %538 : vector<2x64xf32>
    %540 = vector.extract_strided_slice %511 {offsets = [0, 7], sizes = [2, 1], strides = [1, 1]} : vector<2x16xf32> to vector<2x1xf32>
    %541 = vector.broadcast %540 : vector<2x1xf32> to vector<2x64xf32>
    %542 = vector.broadcast %21 : vector<1x64xf32> to vector<2x64xf32>
    %543 = arith.mulf %541, %542 : vector<2x64xf32>
    %544 = vector.extract_strided_slice %511 {offsets = [0, 8], sizes = [2, 1], strides = [1, 1]} : vector<2x16xf32> to vector<2x1xf32>
    %545 = vector.broadcast %544 : vector<2x1xf32> to vector<2x64xf32>
    %546 = vector.broadcast %22 : vector<1x64xf32> to vector<2x64xf32>
    %547 = arith.mulf %545, %546 : vector<2x64xf32>
    %548 = vector.extract_strided_slice %511 {offsets = [0, 9], sizes = [2, 1], strides = [1, 1]} : vector<2x16xf32> to vector<2x1xf32>
    %549 = vector.broadcast %548 : vector<2x1xf32> to vector<2x64xf32>
    %550 = vector.broadcast %23 : vector<1x64xf32> to vector<2x64xf32>
    %551 = arith.mulf %549, %550 : vector<2x64xf32>
    %552 = vector.extract_strided_slice %511 {offsets = [0, 10], sizes = [2, 1], strides = [1, 1]} : vector<2x16xf32> to vector<2x1xf32>
    %553 = vector.broadcast %552 : vector<2x1xf32> to vector<2x64xf32>
    %554 = vector.broadcast %24 : vector<1x64xf32> to vector<2x64xf32>
    %555 = arith.mulf %553, %554 : vector<2x64xf32>
    %556 = vector.extract_strided_slice %511 {offsets = [0, 11], sizes = [2, 1], strides = [1, 1]} : vector<2x16xf32> to vector<2x1xf32>
    %557 = vector.broadcast %556 : vector<2x1xf32> to vector<2x64xf32>
    %558 = vector.broadcast %25 : vector<1x64xf32> to vector<2x64xf32>
    %559 = arith.mulf %557, %558 : vector<2x64xf32>
    %560 = vector.extract_strided_slice %511 {offsets = [0, 12], sizes = [2, 1], strides = [1, 1]} : vector<2x16xf32> to vector<2x1xf32>
    %561 = vector.broadcast %560 : vector<2x1xf32> to vector<2x64xf32>
    %562 = vector.broadcast %26 : vector<1x64xf32> to vector<2x64xf32>
    %563 = arith.mulf %561, %562 : vector<2x64xf32>
    %564 = vector.extract_strided_slice %511 {offsets = [0, 13], sizes = [2, 1], strides = [1, 1]} : vector<2x16xf32> to vector<2x1xf32>
    %565 = vector.broadcast %564 : vector<2x1xf32> to vector<2x64xf32>
    %566 = vector.broadcast %27 : vector<1x64xf32> to vector<2x64xf32>
    %567 = arith.mulf %565, %566 : vector<2x64xf32>
    %568 = vector.extract_strided_slice %511 {offsets = [0, 14], sizes = [2, 1], strides = [1, 1]} : vector<2x16xf32> to vector<2x1xf32>
    %569 = vector.broadcast %568 : vector<2x1xf32> to vector<2x64xf32>
    %570 = vector.broadcast %28 : vector<1x64xf32> to vector<2x64xf32>
    %571 = arith.mulf %569, %570 : vector<2x64xf32>
    %572 = vector.extract_strided_slice %511 {offsets = [0, 15], sizes = [2, 1], strides = [1, 1]} : vector<2x16xf32> to vector<2x1xf32>
    %573 = vector.broadcast %572 : vector<2x1xf32> to vector<2x64xf32>
    %574 = vector.broadcast %29 : vector<1x64xf32> to vector<2x64xf32>
    %575 = arith.mulf %573, %574 : vector<2x64xf32>
    %576 = arith.addf %515, %519 : vector<2x64xf32>
    %577 = arith.addf %523, %527 : vector<2x64xf32>
    %578 = arith.addf %531, %535 : vector<2x64xf32>
    %579 = arith.addf %539, %543 : vector<2x64xf32>
    %580 = arith.addf %547, %551 : vector<2x64xf32>
    %581 = arith.addf %555, %559 : vector<2x64xf32>
    %582 = arith.addf %563, %567 : vector<2x64xf32>
    %583 = arith.addf %571, %575 : vector<2x64xf32>
    %584 = arith.addf %576, %577 : vector<2x64xf32>
    %585 = arith.addf %578, %579 : vector<2x64xf32>
    %586 = arith.addf %580, %581 : vector<2x64xf32>
    %587 = arith.addf %582, %583 : vector<2x64xf32>
    %588 = arith.addf %584, %585 : vector<2x64xf32>
    %589 = arith.addf %586, %587 : vector<2x64xf32>
    %590 = arith.addf %588, %589 : vector<2x64xf32>
    %591 = arith.addf %11, %590 : vector<2x64xf32>
    %cst_37 = arith.constant 5.000000e-01 : f32
    %592 = vector.broadcast %cst_37 : f32 to vector<2x64xf32>
    %593 = arith.mulf %592, %591 : vector<2x64xf32>
    %594 = math.tanh %593 : vector<2x64xf32>
    %cst_38 = arith.constant 5.000000e-01 : f32
    %595 = vector.broadcast %cst_38 : f32 to vector<2x64xf32>
    %596 = arith.mulf %595, %594 : vector<2x64xf32>
    %cst_39 = arith.constant 5.000000e-01 : f32
    %597 = vector.broadcast %cst_39 : f32 to vector<2x64xf32>
    %598 = arith.addf %596, %597 : vector<2x64xf32>
    %599 = vector.extract_strided_slice %598 {offsets = [0, 0], sizes = [2, 16], strides = [1, 1]} : vector<2x64xf32> to vector<2x16xf32>
    %600 = vector.extract_strided_slice %598 {offsets = [0, 16], sizes = [2, 16], strides = [1, 1]} : vector<2x64xf32> to vector<2x16xf32>
    %601 = vector.extract_strided_slice %594 {offsets = [0, 32], sizes = [2, 16], strides = [1, 1]} : vector<2x64xf32> to vector<2x16xf32>
    %602 = vector.extract_strided_slice %598 {offsets = [0, 48], sizes = [2, 16], strides = [1, 1]} : vector<2x64xf32> to vector<2x16xf32>
    %603 = arith.mulf %600, %509 : vector<2x16xf32>
    %604 = arith.mulf %599, %601 : vector<2x16xf32>
    %605 = arith.addf %603, %604 : vector<2x16xf32>
    %606 = math.tanh %605 : vector<2x16xf32>
    %607 = arith.mulf %602, %606 : vector<2x16xf32>
    %608 = vector.extract_strided_slice %607 {offsets = [0, 0], sizes = [2, 1], strides = [1, 1]} : vector<2x16xf32> to vector<2x1xf32>
    %609 = vector.broadcast %608 : vector<2x1xf32> to vector<2x64xf32>
    %610 = vector.broadcast %14 : vector<1x64xf32> to vector<2x64xf32>
    %611 = arith.mulf %609, %610 : vector<2x64xf32>
    %612 = vector.extract_strided_slice %607 {offsets = [0, 1], sizes = [2, 1], strides = [1, 1]} : vector<2x16xf32> to vector<2x1xf32>
    %613 = vector.broadcast %612 : vector<2x1xf32> to vector<2x64xf32>
    %614 = vector.broadcast %15 : vector<1x64xf32> to vector<2x64xf32>
    %615 = arith.mulf %613, %614 : vector<2x64xf32>
    %616 = vector.extract_strided_slice %607 {offsets = [0, 2], sizes = [2, 1], strides = [1, 1]} : vector<2x16xf32> to vector<2x1xf32>
    %617 = vector.broadcast %616 : vector<2x1xf32> to vector<2x64xf32>
    %618 = vector.broadcast %16 : vector<1x64xf32> to vector<2x64xf32>
    %619 = arith.mulf %617, %618 : vector<2x64xf32>
    %620 = vector.extract_strided_slice %607 {offsets = [0, 3], sizes = [2, 1], strides = [1, 1]} : vector<2x16xf32> to vector<2x1xf32>
    %621 = vector.broadcast %620 : vector<2x1xf32> to vector<2x64xf32>
    %622 = vector.broadcast %17 : vector<1x64xf32> to vector<2x64xf32>
    %623 = arith.mulf %621, %622 : vector<2x64xf32>
    %624 = vector.extract_strided_slice %607 {offsets = [0, 4], sizes = [2, 1], strides = [1, 1]} : vector<2x16xf32> to vector<2x1xf32>
    %625 = vector.broadcast %624 : vector<2x1xf32> to vector<2x64xf32>
    %626 = vector.broadcast %18 : vector<1x64xf32> to vector<2x64xf32>
    %627 = arith.mulf %625, %626 : vector<2x64xf32>
    %628 = vector.extract_strided_slice %607 {offsets = [0, 5], sizes = [2, 1], strides = [1, 1]} : vector<2x16xf32> to vector<2x1xf32>
    %629 = vector.broadcast %628 : vector<2x1xf32> to vector<2x64xf32>
    %630 = vector.broadcast %19 : vector<1x64xf32> to vector<2x64xf32>
    %631 = arith.mulf %629, %630 : vector<2x64xf32>
    %632 = vector.extract_strided_slice %607 {offsets = [0, 6], sizes = [2, 1], strides = [1, 1]} : vector<2x16xf32> to vector<2x1xf32>
    %633 = vector.broadcast %632 : vector<2x1xf32> to vector<2x64xf32>
    %634 = vector.broadcast %20 : vector<1x64xf32> to vector<2x64xf32>
    %635 = arith.mulf %633, %634 : vector<2x64xf32>
    %636 = vector.extract_strided_slice %607 {offsets = [0, 7], sizes = [2, 1], strides = [1, 1]} : vector<2x16xf32> to vector<2x1xf32>
    %637 = vector.broadcast %636 : vector<2x1xf32> to vector<2x64xf32>
    %638 = vector.broadcast %21 : vector<1x64xf32> to vector<2x64xf32>
    %639 = arith.mulf %637, %638 : vector<2x64xf32>
    %640 = vector.extract_strided_slice %607 {offsets = [0, 8], sizes = [2, 1], strides = [1, 1]} : vector<2x16xf32> to vector<2x1xf32>
    %641 = vector.broadcast %640 : vector<2x1xf32> to vector<2x64xf32>
    %642 = vector.broadcast %22 : vector<1x64xf32> to vector<2x64xf32>
    %643 = arith.mulf %641, %642 : vector<2x64xf32>
    %644 = vector.extract_strided_slice %607 {offsets = [0, 9], sizes = [2, 1], strides = [1, 1]} : vector<2x16xf32> to vector<2x1xf32>
    %645 = vector.broadcast %644 : vector<2x1xf32> to vector<2x64xf32>
    %646 = vector.broadcast %23 : vector<1x64xf32> to vector<2x64xf32>
    %647 = arith.mulf %645, %646 : vector<2x64xf32>
    %648 = vector.extract_strided_slice %607 {offsets = [0, 10], sizes = [2, 1], strides = [1, 1]} : vector<2x16xf32> to vector<2x1xf32>
    %649 = vector.broadcast %648 : vector<2x1xf32> to vector<2x64xf32>
    %650 = vector.broadcast %24 : vector<1x64xf32> to vector<2x64xf32>
    %651 = arith.mulf %649, %650 : vector<2x64xf32>
    %652 = vector.extract_strided_slice %607 {offsets = [0, 11], sizes = [2, 1], strides = [1, 1]} : vector<2x16xf32> to vector<2x1xf32>
    %653 = vector.broadcast %652 : vector<2x1xf32> to vector<2x64xf32>
    %654 = vector.broadcast %25 : vector<1x64xf32> to vector<2x64xf32>
    %655 = arith.mulf %653, %654 : vector<2x64xf32>
    %656 = vector.extract_strided_slice %607 {offsets = [0, 12], sizes = [2, 1], strides = [1, 1]} : vector<2x16xf32> to vector<2x1xf32>
    %657 = vector.broadcast %656 : vector<2x1xf32> to vector<2x64xf32>
    %658 = vector.broadcast %26 : vector<1x64xf32> to vector<2x64xf32>
    %659 = arith.mulf %657, %658 : vector<2x64xf32>
    %660 = vector.extract_strided_slice %607 {offsets = [0, 13], sizes = [2, 1], strides = [1, 1]} : vector<2x16xf32> to vector<2x1xf32>
    %661 = vector.broadcast %660 : vector<2x1xf32> to vector<2x64xf32>
    %662 = vector.broadcast %27 : vector<1x64xf32> to vector<2x64xf32>
    %663 = arith.mulf %661, %662 : vector<2x64xf32>
    %664 = vector.extract_strided_slice %607 {offsets = [0, 14], sizes = [2, 1], strides = [1, 1]} : vector<2x16xf32> to vector<2x1xf32>
    %665 = vector.broadcast %664 : vector<2x1xf32> to vector<2x64xf32>
    %666 = vector.broadcast %28 : vector<1x64xf32> to vector<2x64xf32>
    %667 = arith.mulf %665, %666 : vector<2x64xf32>
    %668 = vector.extract_strided_slice %607 {offsets = [0, 15], sizes = [2, 1], strides = [1, 1]} : vector<2x16xf32> to vector<2x1xf32>
    %669 = vector.broadcast %668 : vector<2x1xf32> to vector<2x64xf32>
    %670 = vector.broadcast %29 : vector<1x64xf32> to vector<2x64xf32>
    %671 = arith.mulf %669, %670 : vector<2x64xf32>
    %672 = arith.addf %611, %615 : vector<2x64xf32>
    %673 = arith.addf %619, %623 : vector<2x64xf32>
    %674 = arith.addf %627, %631 : vector<2x64xf32>
    %675 = arith.addf %635, %639 : vector<2x64xf32>
    %676 = arith.addf %643, %647 : vector<2x64xf32>
    %677 = arith.addf %651, %655 : vector<2x64xf32>
    %678 = arith.addf %659, %663 : vector<2x64xf32>
    %679 = arith.addf %667, %671 : vector<2x64xf32>
    %680 = arith.addf %672, %673 : vector<2x64xf32>
    %681 = arith.addf %674, %675 : vector<2x64xf32>
    %682 = arith.addf %676, %677 : vector<2x64xf32>
    %683 = arith.addf %678, %679 : vector<2x64xf32>
    %684 = arith.addf %680, %681 : vector<2x64xf32>
    %685 = arith.addf %682, %683 : vector<2x64xf32>
    %686 = arith.addf %684, %685 : vector<2x64xf32>
    %687 = arith.addf %12, %686 : vector<2x64xf32>
    %cst_40 = arith.constant 5.000000e-01 : f32
    %688 = vector.broadcast %cst_40 : f32 to vector<2x64xf32>
    %689 = arith.mulf %688, %687 : vector<2x64xf32>
    %690 = math.tanh %689 : vector<2x64xf32>
    %cst_41 = arith.constant 5.000000e-01 : f32
    %691 = vector.broadcast %cst_41 : f32 to vector<2x64xf32>
    %692 = arith.mulf %691, %690 : vector<2x64xf32>
    %cst_42 = arith.constant 5.000000e-01 : f32
    %693 = vector.broadcast %cst_42 : f32 to vector<2x64xf32>
    %694 = arith.addf %692, %693 : vector<2x64xf32>
    %695 = vector.extract_strided_slice %694 {offsets = [0, 0], sizes = [2, 16], strides = [1, 1]} : vector<2x64xf32> to vector<2x16xf32>
    %696 = vector.extract_strided_slice %694 {offsets = [0, 16], sizes = [2, 16], strides = [1, 1]} : vector<2x64xf32> to vector<2x16xf32>
    %697 = vector.extract_strided_slice %690 {offsets = [0, 32], sizes = [2, 16], strides = [1, 1]} : vector<2x64xf32> to vector<2x16xf32>
    %698 = vector.extract_strided_slice %694 {offsets = [0, 48], sizes = [2, 16], strides = [1, 1]} : vector<2x64xf32> to vector<2x16xf32>
    %699 = arith.mulf %696, %605 : vector<2x16xf32>
    %700 = arith.mulf %695, %697 : vector<2x16xf32>
    %701 = arith.addf %699, %700 : vector<2x16xf32>
    %702 = math.tanh %701 : vector<2x16xf32>
    %703 = arith.mulf %698, %702 : vector<2x16xf32>
    %704 = vector.extract_strided_slice %703 {offsets = [0, 0], sizes = [2, 1], strides = [1, 1]} : vector<2x16xf32> to vector<2x1xf32>
    %705 = vector.broadcast %704 : vector<2x1xf32> to vector<2x64xf32>
    %706 = vector.broadcast %14 : vector<1x64xf32> to vector<2x64xf32>
    %707 = arith.mulf %705, %706 : vector<2x64xf32>
    %708 = vector.extract_strided_slice %703 {offsets = [0, 1], sizes = [2, 1], strides = [1, 1]} : vector<2x16xf32> to vector<2x1xf32>
    %709 = vector.broadcast %708 : vector<2x1xf32> to vector<2x64xf32>
    %710 = vector.broadcast %15 : vector<1x64xf32> to vector<2x64xf32>
    %711 = arith.mulf %709, %710 : vector<2x64xf32>
    %712 = vector.extract_strided_slice %703 {offsets = [0, 2], sizes = [2, 1], strides = [1, 1]} : vector<2x16xf32> to vector<2x1xf32>
    %713 = vector.broadcast %712 : vector<2x1xf32> to vector<2x64xf32>
    %714 = vector.broadcast %16 : vector<1x64xf32> to vector<2x64xf32>
    %715 = arith.mulf %713, %714 : vector<2x64xf32>
    %716 = vector.extract_strided_slice %703 {offsets = [0, 3], sizes = [2, 1], strides = [1, 1]} : vector<2x16xf32> to vector<2x1xf32>
    %717 = vector.broadcast %716 : vector<2x1xf32> to vector<2x64xf32>
    %718 = vector.broadcast %17 : vector<1x64xf32> to vector<2x64xf32>
    %719 = arith.mulf %717, %718 : vector<2x64xf32>
    %720 = vector.extract_strided_slice %703 {offsets = [0, 4], sizes = [2, 1], strides = [1, 1]} : vector<2x16xf32> to vector<2x1xf32>
    %721 = vector.broadcast %720 : vector<2x1xf32> to vector<2x64xf32>
    %722 = vector.broadcast %18 : vector<1x64xf32> to vector<2x64xf32>
    %723 = arith.mulf %721, %722 : vector<2x64xf32>
    %724 = vector.extract_strided_slice %703 {offsets = [0, 5], sizes = [2, 1], strides = [1, 1]} : vector<2x16xf32> to vector<2x1xf32>
    %725 = vector.broadcast %724 : vector<2x1xf32> to vector<2x64xf32>
    %726 = vector.broadcast %19 : vector<1x64xf32> to vector<2x64xf32>
    %727 = arith.mulf %725, %726 : vector<2x64xf32>
    %728 = vector.extract_strided_slice %703 {offsets = [0, 6], sizes = [2, 1], strides = [1, 1]} : vector<2x16xf32> to vector<2x1xf32>
    %729 = vector.broadcast %728 : vector<2x1xf32> to vector<2x64xf32>
    %730 = vector.broadcast %20 : vector<1x64xf32> to vector<2x64xf32>
    %731 = arith.mulf %729, %730 : vector<2x64xf32>
    %732 = vector.extract_strided_slice %703 {offsets = [0, 7], sizes = [2, 1], strides = [1, 1]} : vector<2x16xf32> to vector<2x1xf32>
    %733 = vector.broadcast %732 : vector<2x1xf32> to vector<2x64xf32>
    %734 = vector.broadcast %21 : vector<1x64xf32> to vector<2x64xf32>
    %735 = arith.mulf %733, %734 : vector<2x64xf32>
    %736 = vector.extract_strided_slice %703 {offsets = [0, 8], sizes = [2, 1], strides = [1, 1]} : vector<2x16xf32> to vector<2x1xf32>
    %737 = vector.broadcast %736 : vector<2x1xf32> to vector<2x64xf32>
    %738 = vector.broadcast %22 : vector<1x64xf32> to vector<2x64xf32>
    %739 = arith.mulf %737, %738 : vector<2x64xf32>
    %740 = vector.extract_strided_slice %703 {offsets = [0, 9], sizes = [2, 1], strides = [1, 1]} : vector<2x16xf32> to vector<2x1xf32>
    %741 = vector.broadcast %740 : vector<2x1xf32> to vector<2x64xf32>
    %742 = vector.broadcast %23 : vector<1x64xf32> to vector<2x64xf32>
    %743 = arith.mulf %741, %742 : vector<2x64xf32>
    %744 = vector.extract_strided_slice %703 {offsets = [0, 10], sizes = [2, 1], strides = [1, 1]} : vector<2x16xf32> to vector<2x1xf32>
    %745 = vector.broadcast %744 : vector<2x1xf32> to vector<2x64xf32>
    %746 = vector.broadcast %24 : vector<1x64xf32> to vector<2x64xf32>
    %747 = arith.mulf %745, %746 : vector<2x64xf32>
    %748 = vector.extract_strided_slice %703 {offsets = [0, 11], sizes = [2, 1], strides = [1, 1]} : vector<2x16xf32> to vector<2x1xf32>
    %749 = vector.broadcast %748 : vector<2x1xf32> to vector<2x64xf32>
    %750 = vector.broadcast %25 : vector<1x64xf32> to vector<2x64xf32>
    %751 = arith.mulf %749, %750 : vector<2x64xf32>
    %752 = vector.extract_strided_slice %703 {offsets = [0, 12], sizes = [2, 1], strides = [1, 1]} : vector<2x16xf32> to vector<2x1xf32>
    %753 = vector.broadcast %752 : vector<2x1xf32> to vector<2x64xf32>
    %754 = vector.broadcast %26 : vector<1x64xf32> to vector<2x64xf32>
    %755 = arith.mulf %753, %754 : vector<2x64xf32>
    %756 = vector.extract_strided_slice %703 {offsets = [0, 13], sizes = [2, 1], strides = [1, 1]} : vector<2x16xf32> to vector<2x1xf32>
    %757 = vector.broadcast %756 : vector<2x1xf32> to vector<2x64xf32>
    %758 = vector.broadcast %27 : vector<1x64xf32> to vector<2x64xf32>
    %759 = arith.mulf %757, %758 : vector<2x64xf32>
    %760 = vector.extract_strided_slice %703 {offsets = [0, 14], sizes = [2, 1], strides = [1, 1]} : vector<2x16xf32> to vector<2x1xf32>
    %761 = vector.broadcast %760 : vector<2x1xf32> to vector<2x64xf32>
    %762 = vector.broadcast %28 : vector<1x64xf32> to vector<2x64xf32>
    %763 = arith.mulf %761, %762 : vector<2x64xf32>
    %764 = vector.extract_strided_slice %703 {offsets = [0, 15], sizes = [2, 1], strides = [1, 1]} : vector<2x16xf32> to vector<2x1xf32>
    %765 = vector.broadcast %764 : vector<2x1xf32> to vector<2x64xf32>
    %766 = vector.broadcast %29 : vector<1x64xf32> to vector<2x64xf32>
    %767 = arith.mulf %765, %766 : vector<2x64xf32>
    %768 = arith.addf %707, %711 : vector<2x64xf32>
    %769 = arith.addf %715, %719 : vector<2x64xf32>
    %770 = arith.addf %723, %727 : vector<2x64xf32>
    %771 = arith.addf %731, %735 : vector<2x64xf32>
    %772 = arith.addf %739, %743 : vector<2x64xf32>
    %773 = arith.addf %747, %751 : vector<2x64xf32>
    %774 = arith.addf %755, %759 : vector<2x64xf32>
    %775 = arith.addf %763, %767 : vector<2x64xf32>
    %776 = arith.addf %768, %769 : vector<2x64xf32>
    %777 = arith.addf %770, %771 : vector<2x64xf32>
    %778 = arith.addf %772, %773 : vector<2x64xf32>
    %779 = arith.addf %774, %775 : vector<2x64xf32>
    %780 = arith.addf %776, %777 : vector<2x64xf32>
    %781 = arith.addf %778, %779 : vector<2x64xf32>
    %782 = arith.addf %780, %781 : vector<2x64xf32>
    %783 = arith.addf %13, %782 : vector<2x64xf32>
    %cst_43 = arith.constant 5.000000e-01 : f32
    %784 = vector.broadcast %cst_43 : f32 to vector<2x64xf32>
    %785 = arith.mulf %784, %783 : vector<2x64xf32>
    %786 = math.tanh %785 : vector<2x64xf32>
    %cst_44 = arith.constant 5.000000e-01 : f32
    %787 = vector.broadcast %cst_44 : f32 to vector<2x64xf32>
    %788 = arith.mulf %787, %786 : vector<2x64xf32>
    %cst_45 = arith.constant 5.000000e-01 : f32
    %789 = vector.broadcast %cst_45 : f32 to vector<2x64xf32>
    %790 = arith.addf %788, %789 : vector<2x64xf32>
    %791 = vector.extract_strided_slice %790 {offsets = [0, 0], sizes = [2, 16], strides = [1, 1]} : vector<2x64xf32> to vector<2x16xf32>
    %792 = vector.extract_strided_slice %790 {offsets = [0, 16], sizes = [2, 16], strides = [1, 1]} : vector<2x64xf32> to vector<2x16xf32>
    %793 = vector.extract_strided_slice %786 {offsets = [0, 32], sizes = [2, 16], strides = [1, 1]} : vector<2x64xf32> to vector<2x16xf32>
    %794 = vector.extract_strided_slice %790 {offsets = [0, 48], sizes = [2, 16], strides = [1, 1]} : vector<2x64xf32> to vector<2x16xf32>
    %795 = arith.mulf %792, %701 : vector<2x16xf32>
    %796 = arith.mulf %791, %793 : vector<2x16xf32>
    %797 = arith.addf %795, %796 : vector<2x16xf32>
    %798 = math.tanh %797 : vector<2x16xf32>
    %799 = arith.mulf %794, %798 : vector<2x16xf32>
    %c32 = arith.constant 32 : index
    %c0_46 = arith.constant 0 : index
    %800 = vector.load %arg1[%c32, %c0_46] : memref<128x64xf32, #tpu.memory_space<vmem>>, vector<16x48xf32>
    %cst_47 = arith.constant dense<0.000000e+00> : vector<2x48xf32>
    %801 = tpu.matmul %799, %800, %cst_47 {dimension_numbers = #tpu.dot_dimension_numbers<[1], [0], [0], [1], [0, 0, 1, 1], [], []>} : vector<2x16xf32>, vector<16x48xf32>, vector<2x48xf32> -> vector<2x48xf32>
    %c112 = arith.constant 112 : index
    %c0_48 = arith.constant 0 : index
    %802 = vector.load %arg1[%c112, %c0_48] : memref<128x64xf32, #tpu.memory_space<vmem>>, vector<1x32xf32>
    %c113 = arith.constant 113 : index
    %c0_49 = arith.constant 0 : index
    %803 = vector.load %arg1[%c113, %c0_49] : memref<128x64xf32, #tpu.memory_space<vmem>>, vector<1x32xf32>
    %c114 = arith.constant 114 : index
    %c0_50 = arith.constant 0 : index
    %804 = vector.load %arg1[%c114, %c0_50] : memref<128x64xf32, #tpu.memory_space<vmem>>, vector<1x32xf32>
    %c48 = arith.constant 48 : index
    %c0_51 = arith.constant 0 : index
    %805 = vector.load %arg1[%c48, %c0_51] : memref<128x64xf32, #tpu.memory_space<vmem>>, vector<32x32xf32>
    %c80 = arith.constant 80 : index
    %c0_52 = arith.constant 0 : index
    %806 = vector.load %arg1[%c80, %c0_52] : memref<128x64xf32, #tpu.memory_space<vmem>>, vector<32x32xf32>
    %c117 = arith.constant 117 : index
    %c0_53 = arith.constant 0 : index
    %807 = vector.load %arg1[%c117, %c0_53] : memref<128x64xf32, #tpu.memory_space<vmem>>, vector<1x32xf32>
    %c120 = arith.constant 120 : index
    %c0_54 = arith.constant 0 : index
    %808 = vector.load %arg1[%c120, %c0_54] : memref<128x64xf32, #tpu.memory_space<vmem>>, vector<1x1xf32>
    %809 = vector.extract_strided_slice %801 {offsets = [0, 0], sizes = [2, 32], strides = [1, 1]} : vector<2x48xf32> to vector<2x32xf32>
    %810 = vector.broadcast %802 : vector<1x32xf32> to vector<2x32xf32>
    %811 = arith.addf %809, %810 : vector<2x32xf32>
    %cst_55 = arith.constant 0.000000e+00 : f32
    %812 = vector.broadcast %cst_55 : f32 to vector<2x32xf32>
    %813 = arith.maximumf %811, %812 : vector<2x32xf32>
    %cst_56 = arith.constant dense<0.000000e+00> : vector<2x32xf32>
    %814 = tpu.matmul %813, %805, %cst_56 {dimension_numbers = #tpu.dot_dimension_numbers<[1], [0], [0], [1], [0, 0, 1, 1], [], []>} : vector<2x32xf32>, vector<32x32xf32>, vector<2x32xf32> -> vector<2x32xf32>
    %815 = vector.broadcast %803 : vector<1x32xf32> to vector<2x32xf32>
    %816 = arith.addf %814, %815 : vector<2x32xf32>
    %cst_57 = arith.constant 0.000000e+00 : f32
    %817 = vector.broadcast %cst_57 : f32 to vector<2x32xf32>
    %818 = arith.maximumf %816, %817 : vector<2x32xf32>
    %cst_58 = arith.constant dense<0.000000e+00> : vector<2x32xf32>
    %819 = tpu.matmul %818, %806, %cst_58 {dimension_numbers = #tpu.dot_dimension_numbers<[1], [0], [0], [1], [0, 0, 1, 1], [], []>} : vector<2x32xf32>, vector<32x32xf32>, vector<2x32xf32> -> vector<2x32xf32>
    %820 = vector.broadcast %804 : vector<1x32xf32> to vector<2x32xf32>
    %821 = arith.addf %819, %820 : vector<2x32xf32>
    %cst_59 = arith.constant 0.000000e+00 : f32
    %822 = vector.broadcast %cst_59 : f32 to vector<2x32xf32>
    %823 = arith.maximumf %821, %822 : vector<2x32xf32>
    %824 = vector.broadcast %807 : vector<1x32xf32> to vector<2x32xf32>
    %825 = arith.mulf %823, %824 : vector<2x32xf32>
    %cst_60 = arith.constant dense<0.000000e+00> : vector<2xf32>
    %826 = vector.multi_reduction <add>, %825, %cst_60 [1] : vector<2x32xf32> to vector<2xf32>
    %827 = vector.shape_cast %826 : vector<2xf32> to vector<2x1xf32>
    %828 = vector.broadcast %808 : vector<1x1xf32> to vector<2x1xf32>
    %829 = arith.addf %827, %828 : vector<2x1xf32>
    %c115 = arith.constant 115 : index
    %c32_61 = arith.constant 32 : index
    %830 = vector.load %arg1[%c115, %c32_61] : memref<128x64xf32, #tpu.memory_space<vmem>>, vector<1x16xf32>
    %c116 = arith.constant 116 : index
    %c32_62 = arith.constant 32 : index
    %831 = vector.load %arg1[%c116, %c32_62] : memref<128x64xf32, #tpu.memory_space<vmem>>, vector<1x16xf32>
    %c118 = arith.constant 118 : index
    %c32_63 = arith.constant 32 : index
    %832 = vector.load %arg1[%c118, %c32_63] : memref<128x64xf32, #tpu.memory_space<vmem>>, vector<1x16xf32>
    %c119 = arith.constant 119 : index
    %c32_64 = arith.constant 32 : index
    %833 = vector.load %arg1[%c119, %c32_64] : memref<128x64xf32, #tpu.memory_space<vmem>>, vector<1x16xf32>
    %c120_65 = arith.constant 120 : index
    %c1 = arith.constant 1 : index
    %834 = vector.load %arg1[%c120_65, %c1] : memref<128x64xf32, #tpu.memory_space<vmem>>, vector<1x1xf32>
    %c120_66 = arith.constant 120 : index
    %c2 = arith.constant 2 : index
    %835 = vector.load %arg1[%c120_66, %c2] : memref<128x64xf32, #tpu.memory_space<vmem>>, vector<1x1xf32>
    %c16_67 = arith.constant 16 : index
    %c0_68 = arith.constant 0 : index
    %836 = vector.load %arg0[%c16_67, %c0_68] : memref<19x4xf32, #tpu.memory_space<vmem>>, vector<2x1xf32>
    %c18_69 = arith.constant 18 : index
    %c0_70 = arith.constant 0 : index
    %837 = vector.load %arg0[%c18_69, %c0_70] : memref<19x4xf32, #tpu.memory_space<vmem>>, vector<1x1xf32>
    %838 = vector.extract_strided_slice %801 {offsets = [0, 32], sizes = [2, 16], strides = [1, 1]} : vector<2x48xf32> to vector<2x16xf32>
    %839 = vector.broadcast %836 : vector<2x1xf32> to vector<2x16xf32>
    %840 = vector.broadcast %831 : vector<1x16xf32> to vector<2x16xf32>
    %841 = arith.mulf %839, %840 : vector<2x16xf32>
    %842 = arith.addf %838, %841 : vector<2x16xf32>
    %843 = vector.broadcast %830 : vector<1x16xf32> to vector<2x16xf32>
    %844 = arith.addf %842, %843 : vector<2x16xf32>
    %cst_71 = arith.constant 0.000000e+00 : f32
    %845 = vector.broadcast %cst_71 : f32 to vector<2x16xf32>
    %846 = arith.maximumf %844, %845 : vector<2x16xf32>
    %847 = vector.broadcast %832 : vector<1x16xf32> to vector<2x16xf32>
    %848 = arith.mulf %846, %847 : vector<2x16xf32>
    %cst_72 = arith.constant dense<0.000000e+00> : vector<2xf32>
    %849 = vector.multi_reduction <add>, %848, %cst_72 [1] : vector<2x16xf32> to vector<2xf32>
    %850 = vector.shape_cast %849 : vector<2xf32> to vector<2x1xf32>
    %851 = vector.broadcast %834 : vector<1x1xf32> to vector<2x1xf32>
    %852 = arith.addf %850, %851 : vector<2x1xf32>
    %853 = math.tanh %852 : vector<2x1xf32>
    %854 = vector.broadcast %833 : vector<1x16xf32> to vector<2x16xf32>
    %855 = arith.mulf %846, %854 : vector<2x16xf32>
    %cst_73 = arith.constant dense<0.000000e+00> : vector<2xf32>
    %856 = vector.multi_reduction <add>, %855, %cst_73 [1] : vector<2x16xf32> to vector<2xf32>
    %857 = vector.shape_cast %856 : vector<2xf32> to vector<2x1xf32>
    %858 = vector.broadcast %835 : vector<1x1xf32> to vector<2x1xf32>
    %859 = arith.addf %857, %858 : vector<2x1xf32>
    %cst_74 = arith.constant 9.99999974E-6 : f32
    %860 = vector.broadcast %cst_74 : f32 to vector<2x1xf32>
    %861 = arith.addf %859, %860 : vector<2x1xf32>
    %cst_75 = arith.constant 0.000000e+00 : f32
    %862 = vector.broadcast %cst_75 : f32 to vector<2x1xf32>
    %863 = arith.maximumf %861, %862 : vector<2x1xf32>
    %864 = math.absf %861 : vector<2x1xf32>
    %cst_76 = arith.constant 0.000000e+00 : f32
    %865 = vector.broadcast %cst_76 : f32 to vector<2x1xf32>
    %866 = arith.subf %865, %864 : vector<2x1xf32>
    %867 = math.exp %866 : vector<2x1xf32>
    %cst_77 = arith.constant 1.000000e+00 : f32
    %868 = vector.broadcast %cst_77 : f32 to vector<2x1xf32>
    %869 = arith.addf %868, %867 : vector<2x1xf32>
    %870 = math.log %869 : vector<2x1xf32>
    %871 = arith.addf %863, %870 : vector<2x1xf32>
    %872 = vector.broadcast %837 : vector<1x1xf32> to vector<2x1xf32>
    %873 = arith.mulf %871, %872 : vector<2x1xf32>
    %874 = arith.addf %853, %873 : vector<2x1xf32>
    %cst_78 = arith.constant -1.000000e+00 : f32
    %cst_79 = arith.constant 1.000000e+00 : f32
    %875 = vector.broadcast %cst_78 : f32 to vector<2x1xf32>
    %876 = arith.maximumf %875, %874 : vector<2x1xf32>
    %877 = vector.broadcast %cst_79 : f32 to vector<2x1xf32>
    %878 = arith.minimumf %877, %876 : vector<2x1xf32>
    %879 = tpu.concatenate %829, %853, %871, %878 in 1 : vector<2x1xf32>, vector<2x1xf32>, vector<2x1xf32>, vector<2x1xf32> -> vector<2x4xf32>
    %c0_80 = arith.constant 0 : index
    %c0_81 = arith.constant 0 : index
    %880 = vector.load %arg2[%c0_80, %c0_81] : memref<2x4xf32, #tpu.memory_space<vmem>>, vector<2x4xf32>
    tpu.vector_store %arg2[%c0_80, %c0_81], %879 {strides = array<i32>} : memref<2x4xf32, #tpu.memory_space<vmem>>, vector<2x4xf32>,
    return
  }
}

</mosaic_0001>

<llo_original>
// kernel: critic_forward.1
$region0: #{critic_forward.1}
  #allocation0 [shape = 'u32[]', space=smem, size = 0x4, offset = 0x4, fixed_abs, tag = 'smem constant byte address 0x4 - core index']
  #allocation1 [shape = 'u32[72,128]{1,0:T(1,128)}', space=vmem, size = 0x9000, scoped, tag = 'internal scratch']
  %s0 = inlined_call_operand.vmem [shape: f32[19,4], index: 0, kind: input, shape index: {}]
  %s1 = inlined_call_operand.vmem [shape: f32[128,64], index: 1, kind: input, shape index: {}]
  %s2 = inlined_call_operand.vmem [shape: f32[2,4], index: 2, kind: output, shape index: {}]
  %s3 = sld [smem:[#allocation0]]
  $region18: #{critic_forward.1} parent=0
    _
  %s5 = ssub.s32 1, %s3
  %s6 = scalar_select 0, %s5, %s3
  // Predicated region
  $region2: #{critic_forward.1} parent=0 // pred_check
    _
  $region3: #{critic_forward.1} parent=0 // pred_check_branch
    %8 = sbr.rel (0) target = $region5
  $region4: #{critic_forward.1} parent=0 // pred_region
    _
  $region5: #{critic_forward.1} parent=0 // pred_fallthru
    _
  // Predicated region
  $region6: #{critic_forward.1} parent=0 // pred_check
    _
  $region7: #{critic_forward.1} parent=0 // pred_check_branch
    %10 = sbr.rel (0) target = $region9
  $region8: #{critic_forward.1} parent=0 // pred_region
    _
  $region9: #{critic_forward.1} parent=0 // pred_fallthru
    _
  %v11 = vld [vmem:[%s1] sm:$0xf]
  %v12 = vld [vmem:[%s1 + $0x18] sm:$0x1]
  %v13 = vld [vmem:[%s0] sm:$0xff]
  %v14 = vld [vmem:[%s0 + $0x8] sm:$0xff]
  %v15 = vperm.slane %v12, 0
  %vm16 = vcmask 31744
  %v18 = vsel %vm16, %v13, 0
  %v21 = vsel %vm16, %v14, 0
  %vm23 = vcmask 1043456
  %v25 = vsel %vm23, %v11, 0
  %27 = vmatpush.msra.mxu0 0.0
  %28 = vmatpush.msra.mxu0 0.0
  %29 = vmatpush.msra.mxu0 0.0
  %30 = vmatpush.msra.mxu0 0.0
  %31 = vmatpush.msra.mxu0 0.0
  %32 = vmatpush.msra.mxu0 0.0
  %33 = vmatpush.msra.mxu0 0.0
  %34 = vmatpush.msra.mxu0 0.0
  %35 = vmatpush.msra.mxu0 0.0
  %36 = vmatpush.msra.mxu0 0.0
  %37 = vmatpush.msra.mxu0 0.0
  %38 = vmatpush.msra.mxu0 0.0
  %39 = vmatpush.msra.mxu0 0.0
  %40 = vmatpush.msra.mxu0 0.0
  %41 = vmatpush.msra.mxu0 0.0
  %42 = vmatpush.msra.mxu0 %v25
  %43 = vmatmul.f32.gmra.mxu0 %v18
  %v44 = vpop.f32.mrf.mxu0
  %v45 = vadd.f32 %v15, %v44
  %46 = vmatmul.f32.gmra.mxu0 %v21
  %v47 = vpop.f32.mrf.mxu0
  %v48 = vadd.f32 %v15, %v47
  %49 = vdwg.mxu0
  %v50 = vld [vmem:[%s1 + $0x8] sm:$0x1]
  %v51 = vld [vmem:[%s1 + $0x9] sm:$0x1]
  %v52 = vld [vmem:[%s1 + $0xa] sm:$0x1]
  %v53 = vld [vmem:[%s1 + $0xb] sm:$0x1]
  %v54 = vld [vmem:[%s1 + $0xc] sm:$0x1]
  %v55 = vld [vmem:[%s1 + $0xd] sm:$0x1]
  %v56 = vld [vmem:[%s1 + $0xe] sm:$0x1]
  %v57 = vld [vmem:[%s1 + $0xf] sm:$0x1]
  %v58 = vld [vmem:[%s1 + $0x10] sm:$0x1]
  %v59 = vld [vmem:[%s1 + $0x11] sm:$0x1]
  %v60 = vld [vmem:[%s1 + $0x12] sm:$0x1]
  %v61 = vld [vmem:[%s1 + $0x13] sm:$0x1]
  %v62 = vld [vmem:[%s1 + $0x14] sm:$0x1]
  %v63 = vld [vmem:[%s1 + $0x15] sm:$0x1]
  %v64 = vld [vmem:[%s1 + $0x16] sm:$0x1]
  %v65 = vld [vmem:[%s1 + $0x17] sm:$0x1]
  %v66 = vperm.slane %v50, 0
  %v67 = vmul.f32 %v66, 0.0
  %v68 = vperm.slane %v51, 0
  %v69 = vmul.f32 %v68, 0.0
  %v70 = vperm.slane %v52, 0
  %v71 = vmul.f32 %v70, 0.0
  %v72 = vperm.slane %v53, 0
  %v73 = vmul.f32 %v72, 0.0
  %v74 = vperm.slane %v54, 0
  %v75 = vmul.f32 %v74, 0.0
  %v76 = vperm.slane %v55, 0
  %v77 = vmul.f32 %v76, 0.0
  %v78 = vperm.slane %v56, 0
  %v79 = vmul.f32 %v78, 0.0
  %v80 = vperm.slane %v57, 0
  %v81 = vmul.f32 %v80, 0.0
  %v82 = vperm.slane %v58, 0
  %v83 = vmul.f32 %v82, 0.0
  %v84 = vperm.slane %v59, 0
  %v85 = vmul.f32 %v84, 0.0
  %v86 = vperm.slane %v60, 0
  %v87 = vmul.f32 %v86, 0.0
  %v88 = vperm.slane %v61, 0
  %v89 = vmul.f32 %v88, 0.0
  %v90 = vperm.slane %v62, 0
  %v91 = vmul.f32 %v90, 0.0
  %v92 = vperm.slane %v63, 0
  %v93 = vmul.f32 %v92, 0.0
  %v94 = vperm.slane %v64, 0
  %v95 = vmul.f32 %v94, 0.0
  %v96 = vperm.slane %v65, 0
  %v97 = vmul.f32 %v96, 0.0
  %v98 = vadd.f32 %v67, %v69
  %v99 = vadd.f32 %v71, %v73
  %v100 = vadd.f32 %v75, %v77
  %v101 = vadd.f32 %v79, %v81
  %v102 = vadd.f32 %v83, %v85
  %v103 = vadd.f32 %v87, %v89
  %v104 = vadd.f32 %v91, %v93
  %v105 = vadd.f32 %v95, %v97
  %v106 = vadd.f32 %v98, %v99
  %v107 = vadd.f32 %v100, %v101
  %v108 = vadd.f32 %v102, %v103
  %v109 = vadd.f32 %v104, %v105
  %v110 = vadd.f32 %v106, %v107
  %v111 = vadd.f32 %v108, %v109
  %v112 = vadd.f32 %v110, %v111
  %v113 = vadd.f32 %v45, %v112
  %v114 = vmul.f32 %v113, 0.5
  %v115 = vtanh.pop %v114
  %v116 = vmul.f32 %v115, 0.5
  %v117 = vadd.f32 %v116, 0.5
  %v118 = vmul.f32 %v117, 0.0
  %120 = vrot.lane.b32.xlu0 %v115, 96
  %v121 = vpop.permute.xlu0 %120
  %v123 = vmul.f32 %v117, %v121
  %125 = vrot.lane.b32.xlu0 %v123, 16
  %v126 = vpop.permute.xlu0 %125
  %v128 = vadd.f32 %v118, %v126
  %v129 = vtanh.pop %v128
  %131 = vrot.lane.b32.xlu0 %v129, 32
  %v132 = vpop.permute.xlu0 %131
  %v134 = vmul.f32 %v117, %v132
  %136 = vset.pattern.permute.xlu0 48
  %137 = vperm.xlu0 %136, %v134
  %v138 = vpop.permute.xlu0 %137
  %v140 = vmul.f32 %v138, %v66
  %141 = vset.pattern.permute.xlu0 49
  %142 = vperm.xlu0 %141, %v134
  %v143 = vpop.permute.xlu0 %142
  %v145 = vmul.f32 %v143, %v68
  %146 = vset.pattern.permute.xlu0 50
  %147 = vperm.xlu0 %146, %v134
  %v148 = vpop.permute.xlu0 %147
  %v150 = vmul.f32 %v148, %v70
  %151 = vset.pattern.permute.xlu0 51
  %152 = vperm.xlu0 %151, %v134
  %v153 = vpop.permute.xlu0 %152
  %v155 = vmul.f32 %v153, %v72
  %156 = vset.pattern.permute.xlu0 52
  %157 = vperm.xlu0 %156, %v134
  %v158 = vpop.permute.xlu0 %157
  %v160 = vmul.f32 %v158, %v74
  %161 = vset.pattern.permute.xlu0 53
  %162 = vperm.xlu0 %161, %v134
  %v163 = vpop.permute.xlu0 %162
  %v165 = vmul.f32 %v163, %v76
  %166 = vset.pattern.permute.xlu0 54
  %167 = vperm.xlu0 %166, %v134
  %v168 = vpop.permute.xlu0 %167
  %v170 = vmul.f32 %v168, %v78
  %171 = vset.pattern.permute.xlu0 55
  %172 = vperm.xlu0 %171, %v134
  %v173 = vpop.permute.xlu0 %172
  %v175 = vmul.f32 %v173, %v80
  %176 = vset.pattern.permute.xlu0 56
  %177 = vperm.xlu0 %176, %v134
  %v178 = vpop.permute.xlu0 %177
  %v180 = vmul.f32 %v178, %v82
  %181 = vset.pattern.permute.xlu0 57
  %182 = vperm.xlu0 %181, %v134
  %v183 = vpop.permute.xlu0 %182
  %v185 = vmul.f32 %v183, %v84
  %186 = vset.pattern.permute.xlu0 58
  %187 = vperm.xlu0 %186, %v134
  %v188 = vpop.permute.xlu0 %187
  %v190 = vmul.f32 %v188, %v86
  %191 = vset.pattern.permute.xlu0 59
  %192 = vperm.xlu0 %191, %v134
  %v193 = vpop.permute.xlu0 %192
  %v195 = vmul.f32 %v193, %v88
  %196 = vset.pattern.permute.xlu0 60
  %197 = vperm.xlu0 %196, %v134
  %v198 = vpop.permute.xlu0 %197
  %v200 = vmul.f32 %v198, %v90
  %201 = vset.pattern.permute.xlu0 61
  %202 = vperm.xlu0 %201, %v134
  %v203 = vpop.permute.xlu0 %202
  %v205 = vmul.f32 %v203, %v92
  %206 = vset.pattern.permute.xlu0 62
  %207 = vperm.xlu0 %206, %v134
  %v208 = vpop.permute.xlu0 %207
  %v210 = vmul.f32 %v208, %v94
  %211 = vset.pattern.permute.xlu0 63
  %212 = vperm.xlu0 %211, %v134
  %v213 = vpop.permute.xlu0 %212
  %v215 = vmul.f32 %v213, %v96
  %v216 = vadd.f32 %v140, %v145
  %v217 = vadd.f32 %v150, %v155
  %v218 = vadd.f32 %v160, %v165
  %v219 = vadd.f32 %v170, %v175
  %v220 = vadd.f32 %v180, %v185
  %v221 = vadd.f32 %v190, %v195
  %v222 = vadd.f32 %v200, %v205
  %v223 = vadd.f32 %v210, %v215
  %v224 = vadd.f32 %v216, %v217
  %v225 = vadd.f32 %v218, %v219
  %v226 = vadd.f32 %v220, %v221
  %v227 = vadd.f32 %v222, %v223
  %v228 = vadd.f32 %v224, %v225
  %v229 = vadd.f32 %v226, %v227
  %v230 = vadd.f32 %v228, %v229
  %v232 = vrot.slane %v230, 6
  %v234 = vadd.f32 %v45, %v232
  %v235 = vmul.f32 %v234, 0.5
  %v236 = vtanh.pop %v235
  %v237 = vmul.f32 %v236, 0.5
  %v238 = vadd.f32 %v237, 0.5
  %v240 = vrot.slane %v128, 6
  %v242 = vmul.f32 %v238, %v240
  %244 = vrot.lane.b32.xlu0 %v236, 96
  %v245 = vpop.permute.xlu0 %244
  %v247 = vmul.f32 %v238, %v245
  %249 = vrot.lane.b32.xlu0 %v247, 16
  %v250 = vpop.permute.xlu0 %249
  %v252 = vadd.f32 %v242, %v250
  %v253 = vtanh.pop %v252
  %255 = vrot.lane.b32.xlu0 %v253, 32
  %v256 = vpop.permute.xlu0 %255
  %v258 = vmul.f32 %v238, %v256
  %260 = vset.pattern.permute.xlu0 48
  %261 = vperm.xlu0 %260, %v258
  %v262 = vpop.permute.xlu0 %261
  %v264 = vmul.f32 %v262, %v66
  %265 = vset.pattern.permute.xlu0 49
  %266 = vperm.xlu0 %265, %v258
  %v267 = vpop.permute.xlu0 %266
  %v269 = vmul.f32 %v267, %v68
  %270 = vset.pattern.permute.xlu0 50
  %271 = vperm.xlu0 %270, %v258
  %v272 = vpop.permute.xlu0 %271
  %v274 = vmul.f32 %v272, %v70
  %275 = vset.pattern.permute.xlu0 51
  %276 = vperm.xlu0 %275, %v258
  %v277 = vpop.permute.xlu0 %276
  %v279 = vmul.f32 %v277, %v72
  %280 = vset.pattern.permute.xlu0 52
  %281 = vperm.xlu0 %280, %v258
  %v282 = vpop.permute.xlu0 %281
  %v284 = vmul.f32 %v282, %v74
  %285 = vset.pattern.permute.xlu0 53
  %286 = vperm.xlu0 %285, %v258
  %v287 = vpop.permute.xlu0 %286
  %v289 = vmul.f32 %v287, %v76
  %290 = vset.pattern.permute.xlu0 54
  %291 = vperm.xlu0 %290, %v258
  %v292 = vpop.permute.xlu0 %291
  %v294 = vmul.f32 %v292, %v78
  %295 = vset.pattern.permute.xlu0 55
  %296 = vperm.xlu0 %295, %v258
  %v297 = vpop.permute.xlu0 %296
  %v299 = vmul.f32 %v297, %v80
  %300 = vset.pattern.permute.xlu0 56
  %301 = vperm.xlu0 %300, %v258
  %v302 = vpop.permute.xlu0 %301
  %v304 = vmul.f32 %v302, %v82
  %305 = vset.pattern.permute.xlu0 57
  %306 = vperm.xlu0 %305, %v258
  %v307 = vpop.permute.xlu0 %306
  %v309 = vmul.f32 %v307, %v84
  %310 = vset.pattern.permute.xlu0 58
  %311 = vperm.xlu0 %310, %v258
  %v312 = vpop.permute.xlu0 %311
  %v314 = vmul.f32 %v312, %v86
  %315 = vset.pattern.permute.xlu0 59
  %316 = vperm.xlu0 %315, %v258
  %v317 = vpop.permute.xlu0 %316
  %v319 = vmul.f32 %v317, %v88
  %320 = vset.pattern.permute.xlu0 60
  %321 = vperm.xlu0 %320, %v258
  %v322 = vpop.permute.xlu0 %321
  %v324 = vmul.f32 %v322, %v90
  %325 = vset.pattern.permute.xlu0 61
  %326 = vperm.xlu0 %325, %v258
  %v327 = vpop.permute.xlu0 %326
  %v329 = vmul.f32 %v327, %v92
  %330 = vset.pattern.permute.xlu0 62
  %331 = vperm.xlu0 %330, %v258
  %v332 = vpop.permute.xlu0 %331
  %v334 = vmul.f32 %v332, %v94
  %335 = vset.pattern.permute.xlu0 63
  %336 = vperm.xlu0 %335, %v258
  %v337 = vpop.permute.xlu0 %336
  %v339 = vmul.f32 %v337, %v96
  %v340 = vadd.f32 %v264, %v269
  %v341 = vadd.f32 %v274, %v279
  %v342 = vadd.f32 %v284, %v289
  %v343 = vadd.f32 %v294, %v299
  %v344 = vadd.f32 %v304, %v309
  %v345 = vadd.f32 %v314, %v319
  %v346 = vadd.f32 %v324, %v329
  %v347 = vadd.f32 %v334, %v339
  %v348 = vadd.f32 %v340, %v341
  %v349 = vadd.f32 %v342, %v343
  %v350 = vadd.f32 %v344, %v345
  %v351 = vadd.f32 %v346, %v347
  %v352 = vadd.f32 %v348, %v349
  %v353 = vadd.f32 %v350, %v351
  %v354 = vadd.f32 %v352, %v353
  %v356 = vrot.slane %v354, 6
  %v358 = vadd.f32 %v45, %v356
  %v359 = vmul.f32 %v358, 0.5
  %v360 = vtanh.pop %v359
  %v361 = vmul.f32 %v360, 0.5
  %v362 = vadd.f32 %v361, 0.5
  %v364 = vrot.slane %v252, 6
  %v366 = vmul.f32 %v362, %v364
  %368 = vrot.lane.b32.xlu0 %v360, 96
  %v369 = vpop.permute.xlu0 %368
  %v371 = vmul.f32 %v362, %v369
  %373 = vrot.lane.b32.xlu0 %v371, 16
  %v374 = vpop.permute.xlu0 %373
  %v376 = vadd.f32 %v366, %v374
  %v377 = vtanh.pop %v376
  %379 = vrot.lane.b32.xlu0 %v377, 32
  %v380 = vpop.permute.xlu0 %379
  %v382 = vmul.f32 %v362, %v380
  %384 = vset.pattern.permute.xlu0 48
  %385 = vperm.xlu0 %384, %v382
  %v386 = vpop.permute.xlu0 %385
  %v388 = vmul.f32 %v386, %v66
  %389 = vset.pattern.permute.xlu0 49
  %390 = vperm.xlu0 %389, %v382
  %v391 = vpop.permute.xlu0 %390
  %v393 = vmul.f32 %v391, %v68
  %394 = vset.pattern.permute.xlu0 50
  %395 = vperm.xlu0 %394, %v382
  %v396 = vpop.permute.xlu0 %395
  %v398 = vmul.f32 %v396, %v70
  %399 = vset.pattern.permute.xlu0 51
  %400 = vperm.xlu0 %399, %v382
  %v401 = vpop.permute.xlu0 %400
  %v403 = vmul.f32 %v401, %v72
  %404 = vset.pattern.permute.xlu0 52
  %405 = vperm.xlu0 %404, %v382
  %v406 = vpop.permute.xlu0 %405
  %v408 = vmul.f32 %v406, %v74
  %409 = vset.pattern.permute.xlu0 53
  %410 = vperm.xlu0 %409, %v382
  %v411 = vpop.permute.xlu0 %410
  %v413 = vmul.f32 %v411, %v76
  %414 = vset.pattern.permute.xlu0 54
  %415 = vperm.xlu0 %414, %v382
  %v416 = vpop.permute.xlu0 %415
  %v418 = vmul.f32 %v416, %v78
  %419 = vset.pattern.permute.xlu0 55
  %420 = vperm.xlu0 %419, %v382
  %v421 = vpop.permute.xlu0 %420
  %v423 = vmul.f32 %v421, %v80
  %424 = vset.pattern.permute.xlu0 56
  %425 = vperm.xlu0 %424, %v382
  %v426 = vpop.permute.xlu0 %425
  %v428 = vmul.f32 %v426, %v82
  %429 = vset.pattern.permute.xlu0 57
  %430 = vperm.xlu0 %429, %v382
  %v431 = vpop.permute.xlu0 %430
  %v433 = vmul.f32 %v431, %v84
  %434 = vset.pattern.permute.xlu0 58
  %435 = vperm.xlu0 %434, %v382
  %v436 = vpop.permute.xlu0 %435
  %v438 = vmul.f32 %v436, %v86
  %439 = vset.pattern.permute.xlu0 59
  %440 = vperm.xlu0 %439, %v382
  %v441 = vpop.permute.xlu0 %440
  %v443 = vmul.f32 %v441, %v88
  %444 = vset.pattern.permute.xlu0 60
  %445 = vperm.xlu0 %444, %v382
  %v446 = vpop.permute.xlu0 %445
  %v448 = vmul.f32 %v446, %v90
  %449 = vset.pattern.permute.xlu0 61
  %450 = vperm.xlu0 %449, %v382
  %v451 = vpop.permute.xlu0 %450
  %v453 = vmul.f32 %v451, %v92
  %454 = vset.pattern.permute.xlu0 62
  %455 = vperm.xlu0 %454, %v382
  %v456 = vpop.permute.xlu0 %455
  %v458 = vmul.f32 %v456, %v94
  %459 = vset.pattern.permute.xlu0 63
  %460 = vperm.xlu0 %459, %v382
  %v461 = vpop.permute.xlu0 %460
  %v463 = vmul.f32 %v461, %v96
  %v464 = vadd.f32 %v388, %v393
  %v465 = vadd.f32 %v398, %v403
  %v466 = vadd.f32 %v408, %v413
  %v467 = vadd.f32 %v418, %v423
  %v468 = vadd.f32 %v428, %v433
  %v469 = vadd.f32 %v438, %v443
  %v470 = vadd.f32 %v448, %v453
  %v471 = vadd.f32 %v458, %v463
  %v472 = vadd.f32 %v464, %v465
  %v473 = vadd.f32 %v466, %v467
  %v474 = vadd.f32 %v468, %v469
  %v475 = vadd.f32 %v470, %v471
  %v476 = vadd.f32 %v472, %v473
  %v477 = vadd.f32 %v474, %v475
  %v478 = vadd.f32 %v476, %v477
  %v480 = vrot.slane %v478, 6
  %v482 = vadd.f32 %v45, %v480
  %v483 = vmul.f32 %v482, 0.5
  %v484 = vtanh.pop %v483
  %v485 = vmul.f32 %v484, 0.5
  %v486 = vadd.f32 %v485, 0.5
  %v488 = vrot.slane %v376, 6
  %v490 = vmul.f32 %v486, %v488
  %492 = vrot.lane.b32.xlu0 %v484, 96
  %v493 = vpop.permute.xlu0 %492
  %v495 = vmul.f32 %v486, %v493
  %497 = vrot.lane.b32.xlu0 %v495, 16
  %v498 = vpop.permute.xlu0 %497
  %v500 = vadd.f32 %v490, %v498
  %v501 = vtanh.pop %v500
  %503 = vrot.lane.b32.xlu0 %v501, 32
  %v504 = vpop.permute.xlu0 %503
  %v506 = vmul.f32 %v486, %v504
  %508 = vset.pattern.permute.xlu0 48
  %509 = vperm.xlu0 %508, %v506
  %v510 = vpop.permute.xlu0 %509
  %v512 = vmul.f32 %v510, %v66
  %513 = vset.pattern.permute.xlu0 49
  %514 = vperm.xlu0 %513, %v506
  %v515 = vpop.permute.xlu0 %514
  %v517 = vmul.f32 %v515, %v68
  %518 = vset.pattern.permute.xlu0 50
  %519 = vperm.xlu0 %518, %v506
  %v520 = vpop.permute.xlu0 %519
  %v522 = vmul.f32 %v520, %v70
  %523 = vset.pattern.permute.xlu0 51
  %524 = vperm.xlu0 %523, %v506
  %v525 = vpop.permute.xlu0 %524
  %v527 = vmul.f32 %v525, %v72
  %528 = vset.pattern.permute.xlu0 52
  %529 = vperm.xlu0 %528, %v506
  %v530 = vpop.permute.xlu0 %529
  %v532 = vmul.f32 %v530, %v74
  %533 = vset.pattern.permute.xlu0 53
  %534 = vperm.xlu0 %533, %v506
  %v535 = vpop.permute.xlu0 %534
  %v537 = vmul.f32 %v535, %v76
  %538 = vset.pattern.permute.xlu0 54
  %539 = vperm.xlu0 %538, %v506
  %v540 = vpop.permute.xlu0 %539
  %v542 = vmul.f32 %v540, %v78
  %543 = vset.pattern.permute.xlu0 55
  %544 = vperm.xlu0 %543, %v506
  %v545 = vpop.permute.xlu0 %544
  %v547 = vmul.f32 %v545, %v80
  %548 = vset.pattern.permute.xlu0 56
  %549 = vperm.xlu0 %548, %v506
  %v550 = vpop.permute.xlu0 %549
  %v552 = vmul.f32 %v550, %v82
  %553 = vset.pattern.permute.xlu0 57
  %554 = vperm.xlu0 %553, %v506
  %v555 = vpop.permute.xlu0 %554
  %v557 = vmul.f32 %v555, %v84
  %558 = vset.pattern.permute.xlu0 58
  %559 = vperm.xlu0 %558, %v506
  %v560 = vpop.permute.xlu0 %559
  %v562 = vmul.f32 %v560, %v86
  %563 = vset.pattern.permute.xlu0 59
  %564 = vperm.xlu0 %563, %v506
  %v565 = vpop.permute.xlu0 %564
  %v567 = vmul.f32 %v565, %v88
  %568 = vset.pattern.permute.xlu0 60
  %569 = vperm.xlu0 %568, %v506
  %v570 = vpop.permute.xlu0 %569
  %v572 = vmul.f32 %v570, %v90
  %573 = vset.pattern.permute.xlu0 61
  %574 = vperm.xlu0 %573, %v506
  %v575 = vpop.permute.xlu0 %574
  %v577 = vmul.f32 %v575, %v92
  %578 = vset.pattern.permute.xlu0 62
  %579 = vperm.xlu0 %578, %v506
  %v580 = vpop.permute.xlu0 %579
  %v582 = vmul.f32 %v580, %v94
  %583 = vset.pattern.permute.xlu0 63
  %584 = vperm.xlu0 %583, %v506
  %v585 = vpop.permute.xlu0 %584
  %v587 = vmul.f32 %v585, %v96
  %v588 = vadd.f32 %v512, %v517
  %v589 = vadd.f32 %v522, %v527
  %v590 = vadd.f32 %v532, %v537
  %v591 = vadd.f32 %v542, %v547
  %v592 = vadd.f32 %v552, %v557
  %v593 = vadd.f32 %v562, %v567
  %v594 = vadd.f32 %v572, %v577
  %v595 = vadd.f32 %v582, %v587
  %v596 = vadd.f32 %v588, %v589
  %v597 = vadd.f32 %v590, %v591
  %v598 = vadd.f32 %v592, %v593
  %v599 = vadd.f32 %v594, %v595
  %v600 = vadd.f32 %v596, %v597
  %v601 = vadd.f32 %v598, %v599
  %v602 = vadd.f32 %v600, %v601
  %v604 = vrot.slane %v602, 6
  %v606 = vadd.f32 %v48, %v604
  %v607 = vmul.f32 %v606, 0.5
  %v608 = vtanh.pop %v607
  %v609 = vmul.f32 %v608, 0.5
  %v610 = vadd.f32 %v609, 0.5
  %v612 = vrot.slane %v500, 6
  %v614 = vmul.f32 %v610, %v612
  %616 = vrot.lane.b32.xlu0 %v608, 96
  %v617 = vpop.permute.xlu0 %616
  %v619 = vmul.f32 %v610, %v617
  %621 = vrot.lane.b32.xlu0 %v619, 16
  %v622 = vpop.permute.xlu0 %621
  %v624 = vadd.f32 %v614, %v622
  %v625 = vtanh.pop %v624
  %627 = vrot.lane.b32.xlu0 %v625, 32
  %v628 = vpop.permute.xlu0 %627
  %v630 = vmul.f32 %v610, %v628
  %632 = vset.pattern.permute.xlu0 48
  %633 = vperm.xlu0 %632, %v630
  %v634 = vpop.permute.xlu0 %633
  %v636 = vmul.f32 %v634, %v66
  %637 = vset.pattern.permute.xlu0 49
  %638 = vperm.xlu0 %637, %v630
  %v639 = vpop.permute.xlu0 %638
  %v641 = vmul.f32 %v639, %v68
  %642 = vset.pattern.permute.xlu0 50
  %643 = vperm.xlu0 %642, %v630
  %v644 = vpop.permute.xlu0 %643
  %v646 = vmul.f32 %v644, %v70
  %647 = vset.pattern.permute.xlu0 51
  %648 = vperm.xlu0 %647, %v630
  %v649 = vpop.permute.xlu0 %648
  %v651 = vmul.f32 %v649, %v72
  %652 = vset.pattern.permute.xlu0 52
  %653 = vperm.xlu0 %652, %v630
  %v654 = vpop.permute.xlu0 %653
  %v656 = vmul.f32 %v654, %v74
  %657 = vset.pattern.permute.xlu0 53
  %658 = vperm.xlu0 %657, %v630
  %v659 = vpop.permute.xlu0 %658
  %v661 = vmul.f32 %v659, %v76
  %662 = vset.pattern.permute.xlu0 54
  %663 = vperm.xlu0 %662, %v630
  %v664 = vpop.permute.xlu0 %663
  %v666 = vmul.f32 %v664, %v78
  %667 = vset.pattern.permute.xlu0 55
  %668 = vperm.xlu0 %667, %v630
  %v669 = vpop.permute.xlu0 %668
  %v671 = vmul.f32 %v669, %v80
  %672 = vset.pattern.permute.xlu0 56
  %673 = vperm.xlu0 %672, %v630
  %v674 = vpop.permute.xlu0 %673
  %v676 = vmul.f32 %v674, %v82
  %677 = vset.pattern.permute.xlu0 57
  %678 = vperm.xlu0 %677, %v630
  %v679 = vpop.permute.xlu0 %678
  %v681 = vmul.f32 %v679, %v84
  %682 = vset.pattern.permute.xlu0 58
  %683 = vperm.xlu0 %682, %v630
  %v684 = vpop.permute.xlu0 %683
  %v686 = vmul.f32 %v684, %v86
  %687 = vset.pattern.permute.xlu0 59
  %688 = vperm.xlu0 %687, %v630
  %v689 = vpop.permute.xlu0 %688
  %v691 = vmul.f32 %v689, %v88
  %692 = vset.pattern.permute.xlu0 60
  %693 = vperm.xlu0 %692, %v630
  %v694 = vpop.permute.xlu0 %693
  %v696 = vmul.f32 %v694, %v90
  %697 = vset.pattern.permute.xlu0 61
  %698 = vperm.xlu0 %697, %v630
  %v699 = vpop.permute.xlu0 %698
  %v701 = vmul.f32 %v699, %v92
  %702 = vset.pattern.permute.xlu0 62
  %703 = vperm.xlu0 %702, %v630
  %v704 = vpop.permute.xlu0 %703
  %v706 = vmul.f32 %v704, %v94
  %707 = vset.pattern.permute.xlu0 63
  %708 = vperm.xlu0 %707, %v630
  %v709 = vpop.permute.xlu0 %708
  %v711 = vmul.f32 %v709, %v96
  %v712 = vadd.f32 %v636, %v641
  %v713 = vadd.f32 %v646, %v651
  %v714 = vadd.f32 %v656, %v661
  %v715 = vadd.f32 %v666, %v671
  %v716 = vadd.f32 %v676, %v681
  %v717 = vadd.f32 %v686, %v691
  %v718 = vadd.f32 %v696, %v701
  %v719 = vadd.f32 %v706, %v711
  %v720 = vadd.f32 %v712, %v713
  %v721 = vadd.f32 %v714, %v715
  %v722 = vadd.f32 %v716, %v717
  %v723 = vadd.f32 %v718, %v719
  %v724 = vadd.f32 %v720, %v721
  %v725 = vadd.f32 %v722, %v723
  %v726 = vadd.f32 %v724, %v725
  %v728 = vrot.slane %v726, 6
  %v730 = vadd.f32 %v48, %v728
  %v731 = vmul.f32 %v730, 0.5
  %v732 = vtanh.pop %v731
  %v733 = vmul.f32 %v732, 0.5
  %v734 = vadd.f32 %v733, 0.5
  %v736 = vrot.slane %v624, 6
  %v738 = vmul.f32 %v734, %v736
  %740 = vrot.lane.b32.xlu0 %v732, 96
  %v741 = vpop.permute.xlu0 %740
  %v743 = vmul.f32 %v734, %v741
  %745 = vrot.lane.b32.xlu0 %v743, 16
  %v746 = vpop.permute.xlu0 %745
  %v748 = vadd.f32 %v738, %v746
  %v749 = vtanh.pop %v748
  %751 = vrot.lane.b32.xlu0 %v749, 32
  %v752 = vpop.permute.xlu0 %751
  %v754 = vmul.f32 %v734, %v752
  %756 = vset.pattern.permute.xlu0 48
  %757 = vperm.xlu0 %756, %v754
  %v758 = vpop.permute.xlu0 %757
  %v760 = vmul.f32 %v758, %v66
  %761 = vset.pattern.permute.xlu0 49
  %762 = vperm.xlu0 %761, %v754
  %v763 = vpop.permute.xlu0 %762
  %v765 = vmul.f32 %v763, %v68
  %766 = vset.pattern.permute.xlu0 50
  %767 = vperm.xlu0 %766, %v754
  %v768 = vpop.permute.xlu0 %767
  %v770 = vmul.f32 %v768, %v70
  %771 = vset.pattern.permute.xlu0 51
  %772 = vperm.xlu0 %771, %v754
  %v773 = vpop.permute.xlu0 %772
  %v775 = vmul.f32 %v773, %v72
  %776 = vset.pattern.permute.xlu0 52
  %777 = vperm.xlu0 %776, %v754
  %v778 = vpop.permute.xlu0 %777
  %v780 = vmul.f32 %v778, %v74
  %781 = vset.pattern.permute.xlu0 53
  %782 = vperm.xlu0 %781, %v754
  %v783 = vpop.permute.xlu0 %782
  %v785 = vmul.f32 %v783, %v76
  %786 = vset.pattern.permute.xlu0 54
  %787 = vperm.xlu0 %786, %v754
  %v788 = vpop.permute.xlu0 %787
  %v790 = vmul.f32 %v788, %v78
  %791 = vset.pattern.permute.xlu0 55
  %792 = vperm.xlu0 %791, %v754
  %v793 = vpop.permute.xlu0 %792
  %v795 = vmul.f32 %v793, %v80
  %796 = vset.pattern.permute.xlu0 56
  %797 = vperm.xlu0 %796, %v754
  %v798 = vpop.permute.xlu0 %797
  %v800 = vmul.f32 %v798, %v82
  %801 = vset.pattern.permute.xlu0 57
  %802 = vperm.xlu0 %801, %v754
  %v803 = vpop.permute.xlu0 %802
  %v805 = vmul.f32 %v803, %v84
  %806 = vset.pattern.permute.xlu0 58
  %807 = vperm.xlu0 %806, %v754
  %v808 = vpop.permute.xlu0 %807
  %v810 = vmul.f32 %v808, %v86
  %811 = vset.pattern.permute.xlu0 59
  %812 = vperm.xlu0 %811, %v754
  %v813 = vpop.permute.xlu0 %812
  %v815 = vmul.f32 %v813, %v88
  %816 = vset.pattern.permute.xlu0 60
  %817 = vperm.xlu0 %816, %v754
  %v818 = vpop.permute.xlu0 %817
  %v820 = vmul.f32 %v818, %v90
  %821 = vset.pattern.permute.xlu0 61
  %822 = vperm.xlu0 %821, %v754
  %v823 = vpop.permute.xlu0 %822
  %v825 = vmul.f32 %v823, %v92
  %826 = vset.pattern.permute.xlu0 62
  %827 = vperm.xlu0 %826, %v754
  %v828 = vpop.permute.xlu0 %827
  %v830 = vmul.f32 %v828, %v94
  %831 = vset.pattern.permute.xlu0 63
  %832 = vperm.xlu0 %831, %v754
  %v833 = vpop.permute.xlu0 %832
  %v835 = vmul.f32 %v833, %v96
  %v836 = vadd.f32 %v760, %v765
  %v837 = vadd.f32 %v770, %v775
  %v838 = vadd.f32 %v780, %v785
  %v839 = vadd.f32 %v790, %v795
  %v840 = vadd.f32 %v800, %v805
  %v841 = vadd.f32 %v810, %v815
  %v842 = vadd.f32 %v820, %v825
  %v843 = vadd.f32 %v830, %v835
  %v844 = vadd.f32 %v836, %v837
  %v845 = vadd.f32 %v838, %v839
  %v846 = vadd.f32 %v840, %v841
  %v847 = vadd.f32 %v842, %v843
  %v848 = vadd.f32 %v844, %v845
  %v849 = vadd.f32 %v846, %v847
  %v850 = vadd.f32 %v848, %v849
  %v852 = vrot.slane %v850, 6
  %v854 = vadd.f32 %v48, %v852
  %v855 = vmul.f32 %v854, 0.5
  %v856 = vtanh.pop %v855
  %v857 = vmul.f32 %v856, 0.5
  %v858 = vadd.f32 %v857, 0.5
  %v860 = vrot.slane %v748, 6
  %v862 = vmul.f32 %v858, %v860
  %864 = vrot.lane.b32.xlu0 %v856, 96
  %v865 = vpop.permute.xlu0 %864
  %v867 = vmul.f32 %v858, %v865
  %869 = vrot.lane.b32.xlu0 %v867, 16
  %v870 = vpop.permute.xlu0 %869
  %v872 = vadd.f32 %v862, %v870
  %v873 = vtanh.pop %v872
  %875 = vrot.lane.b32.xlu0 %v873, 32
  %v876 = vpop.permute.xlu0 %875
  %v878 = vmul.f32 %v858, %v876
  %880 = vset.pattern.permute.xlu0 48
  %881 = vperm.xlu0 %880, %v878
  %v882 = vpop.permute.xlu0 %881
  %v884 = vmul.f32 %v882, %v66
  %885 = vset.pattern.permute.xlu0 49
  %886 = vperm.xlu0 %885, %v878
  %v887 = vpop.permute.xlu0 %886
  %v889 = vmul.f32 %v887, %v68
  %890 = vset.pattern.permute.xlu0 50
  %891 = vperm.xlu0 %890, %v878
  %v892 = vpop.permute.xlu0 %891
  %v894 = vmul.f32 %v892, %v70
  %895 = vset.pattern.permute.xlu0 51
  %896 = vperm.xlu0 %895, %v878
  %v897 = vpop.permute.xlu0 %896
  %v899 = vmul.f32 %v897, %v72
  %900 = vset.pattern.permute.xlu0 52
  %901 = vperm.xlu0 %900, %v878
  %v902 = vpop.permute.xlu0 %901
  %v904 = vmul.f32 %v902, %v74
  %905 = vset.pattern.permute.xlu0 53
  %906 = vperm.xlu0 %905, %v878
  %v907 = vpop.permute.xlu0 %906
  %v909 = vmul.f32 %v907, %v76
  %910 = vset.pattern.permute.xlu0 54
  %911 = vperm.xlu0 %910, %v878
  %v912 = vpop.permute.xlu0 %911
  %v914 = vmul.f32 %v912, %v78
  %915 = vset.pattern.permute.xlu0 55
  %916 = vperm.xlu0 %915, %v878
  %v917 = vpop.permute.xlu0 %916
  %v919 = vmul.f32 %v917, %v80
  %920 = vset.pattern.permute.xlu0 56
  %921 = vperm.xlu0 %920, %v878
  %v922 = vpop.permute.xlu0 %921
  %v924 = vmul.f32 %v922, %v82
  %925 = vset.pattern.permute.xlu0 57
  %926 = vperm.xlu0 %925, %v878
  %v927 = vpop.permute.xlu0 %926
  %v929 = vmul.f32 %v927, %v84
  %930 = vset.pattern.permute.xlu0 58
  %931 = vperm.xlu0 %930, %v878
  %v932 = vpop.permute.xlu0 %931
  %v934 = vmul.f32 %v932, %v86
  %935 = vset.pattern.permute.xlu0 59
  %936 = vperm.xlu0 %935, %v878
  %v937 = vpop.permute.xlu0 %936
  %v939 = vmul.f32 %v937, %v88
  %940 = vset.pattern.permute.xlu0 60
  %941 = vperm.xlu0 %940, %v878
  %v942 = vpop.permute.xlu0 %941
  %v944 = vmul.f32 %v942, %v90
  %945 = vset.pattern.permute.xlu0 61
  %946 = vperm.xlu0 %945, %v878
  %v947 = vpop.permute.xlu0 %946
  %v949 = vmul.f32 %v947, %v92
  %950 = vset.pattern.permute.xlu0 62
  %951 = vperm.xlu0 %950, %v878
  %v952 = vpop.permute.xlu0 %951
  %v954 = vmul.f32 %v952, %v94
  %955 = vset.pattern.permute.xlu0 63
  %956 = vperm.xlu0 %955, %v878
  %v957 = vpop.permute.xlu0 %956
  %v959 = vmul.f32 %v957, %v96
  %v960 = vadd.f32 %v884, %v889
  %v961 = vadd.f32 %v894, %v899
  %v962 = vadd.f32 %v904, %v909
  %v963 = vadd.f32 %v914, %v919
  %v964 = vadd.f32 %v924, %v929
  %v965 = vadd.f32 %v934, %v939
  %v966 = vadd.f32 %v944, %v949
  %v967 = vadd.f32 %v954, %v959
  %v968 = vadd.f32 %v960, %v961
  %v969 = vadd.f32 %v962, %v963
  %v970 = vadd.f32 %v964, %v965
  %v971 = vadd.f32 %v966, %v967
  %v972 = vadd.f32 %v968, %v969
  %v973 = vadd.f32 %v970, %v971
  %v974 = vadd.f32 %v972, %v973
  %v976 = vrot.slane %v974, 6
  %v978 = vadd.f32 %v48, %v976
  %v979 = vmul.f32 %v978, 0.5
  %v980 = vtanh.pop %v979
  %v981 = vmul.f32 %v980, 0.5
  %v982 = vadd.f32 %v981, 0.5
  %v984 = vrot.slane %v872, 6
  %v986 = vmul.f32 %v982, %v984
  %988 = vrot.lane.b32.xlu0 %v980, 96
  %v989 = vpop.permute.xlu0 %988
  %v991 = vmul.f32 %v982, %v989
  %993 = vrot.lane.b32.xlu0 %v991, 16
  %v994 = vpop.permute.xlu0 %993
  %v996 = vadd.f32 %v986, %v994
  %v997 = vtanh.pop %v996
  %999 = vrot.lane.b32.xlu0 %v997, 32
  %v1000 = vpop.permute.xlu0 %999
  %v1002 = vmul.f32 %v982, %v1000
  %v1003 = vld [vmem:[%s1 + $0x20] sm:$0xff]
  %v1004 = vld [vmem:[%s1 + $0x28] sm:$0xff]
  %v1006 = vrot.slane %v1002, 6
  %1007 = vrot.lane.b32.xlu0 %v1006, 80
  %v1008 = vpop.permute.xlu0 %1007
  %vm1009 = vcmask 130048
  %v1010 = vsel %vm1009, %v1008, 0
  %1012 = vmatpush.msra.mxu0 0.0
  %1013 = vmatpush.msra.mxu0 0.0
  %1014 = vmatpush.msra.mxu0 0.0
  %1015 = vmatpush.msra.mxu0 0.0
  %1016 = vmatpush.msra.mxu0 0.0
  %1017 = vmatpush.msra.mxu0 0.0
  %1018 = vmatpush.msra.mxu0 0.0
  %1019 = vmatpush.msra.mxu0 0.0
  %1020 = vmatpush.msra.mxu0 0.0
  %1021 = vmatpush.msra.mxu0 0.0
  %1022 = vmatpush.msra.mxu0 0.0
  %1023 = vmatpush.msra.mxu0 0.0
  %1024 = vmatpush.msra.mxu0 0.0
  %1025 = vmatpush.msra.mxu0 0.0
  %1026 = vmatpush.msra.mxu0 %v1004
  %1027 = vmatpush.msra.mxu0 %v1003
  %1028 = vmatmul.f32.gmra.mxu0 %v1010
  %v1029 = vpop.f32.mrf.mxu0
  %v1030 = vadd.f32 0.0, %v1029
  %1031 = vdwg.mxu0
  %v1032 = vld [vmem:[%s1 + $0x70] sm:$0x1]
  %v1033 = vld [vmem:[%s1 + $0x71] sm:$0x1]
  %v1034 = vld [vmem:[%s1 + $0x72] sm:$0x1]
  %v1035 = vld [vmem:[%s1 + $0x30] sm:$0xff]
  %v1036 = vld [vmem:[%s1 + $0x38] sm:$0xff]
  %v1037 = vld [vmem:[%s1 + $0x40] sm:$0xff]
  %v1038 = vld [vmem:[%s1 + $0x48] sm:$0xff]
  %v1039 = vld [vmem:[%s1 + $0x50] sm:$0xff]
  %v1040 = vld [vmem:[%s1 + $0x58] sm:$0xff]
  %v1041 = vld [vmem:[%s1 + $0x60] sm:$0xff]
  %v1042 = vld [vmem:[%s1 + $0x68] sm:$0xff]
  %v1043 = vld [vmem:[%s1 + $0x75] sm:$0x1]
  %v1044 = vld [vmem:[%s1 + $0x78] sm:$0x1]
  %v1045 = vperm.slane %v1032, 0
  %v1046 = vadd.f32 %v1030, %v1045
  %v1047 = vmax.f32 %v1046, 0.0
  %v1048 = vperm.slane %v1033, 0
  %vm1049 = vcmask 261120
  %v1051 = vsel %vm1049, %v1047, 0
  %1053 = vmatpush.msra.mxu0 0.0
  %1054 = vmatpush.msra.mxu0 0.0
  %1055 = vmatpush.msra.mxu0 0.0
  %1056 = vmatpush.msra.mxu0 0.0
  %1057 = vmatpush.msra.mxu0 0.0
  %1058 = vmatpush.msra.mxu0 0.0
  %1059 = vmatpush.msra.mxu0 0.0
  %1060 = vmatpush.msra.mxu0 0.0
  %1061 = vmatpush.msra.mxu0 0.0
  %1062 = vmatpush.msra.mxu0 0.0
  %1063 = vmatpush.msra.mxu0 0.0
  %1064 = vmatpush.msra.mxu0 0.0
  %1065 = vmatpush.msra.mxu0 %v1038
  %1066 = vmatpush.msra.mxu0 %v1037
  %1067 = vmatpush.msra.mxu0 %v1036
  %1068 = vmatpush.msra.mxu0 %v1035
  %1069 = vmatmul.f32.gmra.mxu0 %v1051
  %v1070 = vpop.f32.mrf.mxu0
  %v1071 = vadd.f32 %v1048, %v1070
  %1072 = vdwg.mxu0
  %v1073 = vmax.f32 %v1071, 0.0
  %v1074 = vperm.slane %v1034, 0
  %v1076 = vsel %vm1049, %v1073, 0
  %1078 = vmatpush.msra.mxu0 0.0
  %1079 = vmatpush.msra.mxu0 0.0
  %1080 = vmatpush.msra.mxu0 0.0
  %1081 = vmatpush.msra.mxu0 0.0
  %1082 = vmatpush.msra.mxu0 0.0
  %1083 = vmatpush.msra.mxu0 0.0
  %1084 = vmatpush.msra.mxu0 0.0
  %1085 = vmatpush.msra.mxu0 0.0
  %1086 = vmatpush.msra.mxu0 0.0
  %1087 = vmatpush.msra.mxu0 0.0
  %1088 = vmatpush.msra.mxu0 0.0
  %1089 = vmatpush.msra.mxu0 0.0
  %1090 = vmatpush.msra.mxu0 %v1042
  %1091 = vmatpush.msra.mxu0 %v1041
  %1092 = vmatpush.msra.mxu0 %v1040
  %1093 = vmatpush.msra.mxu0 %v1039
  %1094 = vmatmul.f32.gmra.mxu0 %v1076
  %v1095 = vpop.f32.mrf.mxu0
  %v1096 = vadd.f32 %v1074, %v1095
  %1097 = vdwg.mxu0
  %v1098 = vmax.f32 %v1096, 0.0
  %v1099 = vperm.slane %v1043, 0
  %v1100 = vmul.f32 %v1098, %v1099
  %vm1101 = vcmask 254976
  %v1102 = vsel %vm1101, %v1100, 0.0
  %1103 = vadd.xlane.f32.xlu0 %v1102
  %v1104 = vpop.xlane.xlu0 %1103
  %v1105 = vperm.slane %v1044, 0
  %v1106 = vadd.f32 %v1104, %v1105
  %v1107 = vld [vmem:[%s1 + $0x73] sm:$0x1]
  %v1108 = vld [vmem:[%s1 + $0x74] sm:$0x1]
  %v1109 = vld [vmem:[%s1 + $0x76] sm:$0x1]
  %v1110 = vld [vmem:[%s1 + $0x77] sm:$0x1]
  %v1111 = vld [vmem:[%s0 + $0x10] sm:$0x3]
  %v1112 = vld [vmem:[%s0 + $0x12] sm:$0x1]
  %1114 = vset.pattern.permute.xlu0 0
  %1115 = vperm.xlu0 %1114, %v1111
  %v1116 = vpop.permute.xlu0 %1115
  %v1118 = vperm.slane %v1108, 0
  %v1119 = vmul.f32 %v1116, %v1118
  %v1120 = vadd.f32 %v1030, %v1119
  %v1121 = vperm.slane %v1107, 0
  %v1122 = vadd.f32 %v1120, %v1121
  %v1123 = vmax.f32 %v1122, 0.0
  %v1124 = vperm.slane %v1109, 0
  %v1125 = vmul.f32 %v1123, %v1124
  %1127 = vrot.lane.b32.xlu0 %v1125, 96
  %v1128 = vpop.permute.xlu0 %1127
  %vm1130 = vcmask 123904
  %v1131 = vsel %vm1130, %v1128, 0.0
  %1132 = vadd.xlane.f32.xlu0 %v1131
  %v1133 = vpop.xlane.xlu0 %1132
  %v1134 = vadd.f32 %v1133, %v1105
  %v1135 = vtanh.pop %v1134
  %v1136 = vperm.slane %v1110, 0
  %v1137 = vmul.f32 %v1123, %v1136
  %1139 = vrot.lane.b32.xlu0 %v1137, 96
  %v1140 = vpop.permute.xlu0 %1139
  %v1142 = vsel %vm1130, %v1140, 0.0
  %1143 = vadd.xlane.f32.xlu0 %v1142
  %v1144 = vpop.xlane.xlu0 %1143
  %v1145 = vadd.f32 %v1144, %v1105
  %v1146 = vadd.f32 %v1145, 1e-05
  %v1147 = vmax.f32 %v1146, 0.0
  %v1148 = vand.u32 2147483647, %v1146
  %v1149 = vsub.f32 0.0, %v1148
  %v1150 = vmul.f32 %v1149, 1.442695
  %v1151 = vpow.pop %v1150
  %v1152 = vadd.f32 %v1151, 1.0
  %v1153 = vlog2.pop %v1152
  %v1154 = vmul.f32 %v1153, 0.6931472
  %v1155 = vadd.f32 %v1147, %v1154
  %v1156 = vperm.slane %v1112, 0
  %1158 = vrot.lane.b32.xlu0 %v1156, 2
  %v1159 = vpop.permute.xlu0 %1158
  %v1161 = vmul.f32 %v1155, %v1159
  %1163 = vrot.lane.b32.xlu0 %v1161, 127
  %v1164 = vpop.permute.xlu0 %1163
  %v1166 = vadd.f32 %v1135, %v1164
  %v1167 = vmax.f32 %v1166, -1.0
  %v1168 = vmin.f32 %v1167, 1.0
  %1170 = vrot.lane.b32.xlu0 %v1168, 2
  %v1171 = vpop.permute.xlu0 %1170
  %vm1173 = vcmask 7168
  %v1174 = vsel %vm1173, %v1106, %v1135
  %vm1175 = vcmask 15360
  %v1176 = vsel %vm1175, %v1174, %v1155
  %vm1177 = vcmask 23552
  %v1178 = vsel %vm1177, %v1176, %v1171
  %vm1179 = vcmask 25600
  %1180 = vst.msk [vmem:[%s2] sm:$0x3] %vm1179, %v1178
  // Predicated region
  $region10: #{critic_forward.1} parent=0 // pred_check
    _
  $region11: #{critic_forward.1} parent=0 // pred_check_branch
    %1182 = sbr.rel (0) target = $region13
  $region12: #{critic_forward.1} parent=0 // pred_region
    _
  $region13: #{critic_forward.1} parent=0 // pred_fallthru
    _
  // Predicated region
  $region14: #{critic_forward.1} parent=0 // pred_check
    _
  $region15: #{critic_forward.1} parent=0 // pred_check_branch
    %1184 = sbr.rel (0) target = $region17
  $region16: #{critic_forward.1} parent=0 // pred_region
    _
  $region17: #{critic_forward.1} parent=0 // pred_fallthru
    _

</llo_original>
